<compile_context>
chip_gen: v7x
topology: tpu7x:2x2x1
jax: 0.10.0
libtpu: 0.0.40
codegen_flags: <defaults>
</compile_context>

<pallas_src>
import functools
import math

import jax
import jax.numpy as jnp
import numpy as np
from jax.experimental import pallas as pl
from jax.experimental.pallas import tpu as pltpu


LN_EPS = 1e-6          # matches nn.LayerNorm(..., eps=1e-06)
MASK_BIAS = -1e30      # large finite negative instead of -inf (no NaN hazard)


def _layer_norm(x, gamma, beta, eps=LN_EPS):
    # x: (M, D), gamma/beta: (1, D). Matches torch.nn.LayerNorm (biased var).
    mean = jnp.mean(x, axis=-1, keepdims=True)
    var = jnp.mean((x - mean) ** 2, axis=-1, keepdims=True)
    return (x - mean) * jax.lax.rsqrt(var + eps) * gamma + beta


# ----------------------------------------------------------------------------
# Fused multi-layer encoder kernel
# ----------------------------------------------------------------------------
def encoder_kernel(
    x_ref, bias_ref,
    wqkv_ref, bqkv_ref, wout_ref, bout_ref, g1_ref, be1_ref,
    w1_ref, b1_ref, w2_ref, b2_ref, g2_ref, be2_ref,
    o_ref,
    ctx_scratch,
    *, Bt, S, D, heads, d_k, d_v,
):
    # Layer 0 of this batch block: seed the resident activation.  The output
    # block index is constant along the layer axis, so o_ref stays in VMEM for
    # the whole layer loop and is written back to HBM only once.
    @pl.when(pl.program_id(1) == 0)
    def _():
        o_ref[...] = x_ref[...]

    x = o_ref[...].reshape(Bt * S, D)            # f32 residual stream

    # ---- fused Q/K/V projection: bf16 operands on the MXU, f32 accumulate ----
    qkv = jnp.dot(x.astype(jnp.bfloat16), wqkv_ref[0],
                  preferred_element_type=jnp.float32) + bqkv_ref[0]
    hk = heads * d_k
    hv = heads * d_v

    # Fold 1/sqrt(d_k) into q (O(S*H*d_k) VALU work) instead of scaling the
    # S^2 score matrix per head per layer.
    qf = qkv[:, :hk] * (1.0 / math.sqrt(d_k))
    kf = qkv[:, hk:2 * hk]
    vf = qkv[:, 2 * hk:]

    # Pack heads into the leading batch axis: (heads*Bt, S, d).  Only
    # major-axis concatenation + major reshapes (layout-safe).
    def to_heads(flat, d):
        parts = [flat[:, h * d:(h + 1) * d].reshape(1, Bt, S, d)
                 for h in range(heads)]
        return jnp.concatenate(parts, axis=0).reshape(heads * Bt, S, d)

    q = to_heads(qf, d_k).astype(jnp.bfloat16)
    k = to_heads(kf, d_k).astype(jnp.bfloat16)
    v = to_heads(vf, d_v).astype(jnp.bfloat16)

    # ---- one batched score matmul for all heads and batch elements ----
    s = jnp.einsum('bqd,bkd->bqk', q, k, preferred_element_type=jnp.float32)
    # additive mask bias (0 keep / -1e30 masked), broadcast across heads.
    # NOTE: a fully-masked row yields a uniform softmax here instead of the
    # reference's NaN from -inf; harmless for causal/padding-of-keys masks.
    s = s + jnp.tile(bias_ref[...].astype(jnp.float32), (heads, 1, 1))

    # ---- softmax with deferred normalization ----
    m = jnp.max(s, axis=-1, keepdims=True)
    p = jnp.exp(s - m)                           # unnormalized, in (0, 1]
    l = jnp.sum(p, axis=-1, keepdims=True)
    # dropout on attention weights is identity in eval mode
    ctx = jnp.einsum('bqk,bkd->bqd', p.astype(jnp.bfloat16), v,
                     preferred_element_type=jnp.float32)
    ctx = ctx * pl.reciprocal(l, approx=False)   # exact reciprocal (EUP slot)

    # Re-pack heads along the lane axis through a VMEM scratch, then ONE
    # output projection with full contraction K = heads*d_v.
    ctx4 = ctx.reshape(heads, Bt, S, d_v)
    for h in range(heads):                       # static unroll, stores only
        ctx_scratch[:, :, h * d_v:(h + 1) * d_v] = ctx4[h]
    attn = jnp.dot(ctx_scratch[...].reshape(Bt * S, hv).astype(jnp.bfloat16),
                   wout_ref[0], preferred_element_type=jnp.float32) + bout_ref[0]

    # residual + LayerNorm (attention block), f32
    y = _layer_norm(x + attn, g1_ref[0], be1_ref[0])

    # ---- position-wise FFN.  NOTE: the PyTorch module applies ReLU after
    # BOTH linears. ----
    h1 = jnp.maximum(
        jnp.dot(y.astype(jnp.bfloat16), w1_ref[0],
                preferred_element_type=jnp.float32) + b1_ref[0], 0.0)
    h2 = jnp.maximum(
        jnp.dot(h1.astype(jnp.bfloat16), w2_ref[0],
                preferred_element_type=jnp.float32) + b2_ref[0], 0.0)

    # residual + LayerNorm (FFN block) -> next layer's activation
    out = _layer_norm(h2 + y, g2_ref[0], be2_ref[0])
    o_ref[...] = out.reshape(Bt, S, D).astype(o_ref.dtype)


# ----------------------------------------------------------------------------
# Wrapper: ONE pallas_call for the whole N-layer encoder
# ----------------------------------------------------------------------------
def _pick_batch_block(B, S, target_rows=512, min_blocks=2):
    """Largest divisor of B with Bt*S <~ target_rows, keeping >= min_blocks
    grid blocks when possible (feeds both TensorCores on v7x).  On v5e/v6e a
    caller may pass min_blocks=1 / larger target_rows to favor fewer, larger
    blocks (weights are re-DMA'd once per batch block)."""
    cap = max(1, target_rows // max(S, 1))
    if B >= min_blocks:
        cap = min(cap, max(1, B // min_blocks))
    bt = max(1, min(B, cap))
    while B % bt:
        bt -= 1
    return bt


def _stack_params(layer_params):
    """Stack per-layer params along a leading layer axis.  Weight matrices are
    stored in bf16 (MXU operands, half the DMA bytes); biases / LN params f32."""
    def stack(key, dtype):
        return jnp.stack([p[key] for p in layer_params], axis=0).astype(dtype)

    wqkv = jnp.stack([jnp.concatenate([p["wq"], p["wk"], p["wv"]], axis=1)
                      for p in layer_params], axis=0).astype(jnp.bfloat16)
    bqkv = jnp.stack([jnp.concatenate([p["bq"], p["bk"], p["bv"]], axis=1)
                      for p in layer_params], axis=0).astype(jnp.float32)
    return [wqkv, bqkv,
            stack("wout", jnp.bfloat16), stack("bout", jnp.float32),
            stack("g1", jnp.float32), stack("be1", jnp.float32),
            stack("w1", jnp.bfloat16), stack("b1", jnp.float32),
            stack("w2", jnp.bfloat16), stack("b2", jnp.float32),
            stack("g2", jnp.float32), stack("be2", jnp.float32)]


def _vmem_estimate_bytes(Bt, S, D, heads, d_k, d_v, F, weights):
    f32, bf16 = 4, 2
    hk, hv = heads * d_k, heads * d_v
    hb = heads * Bt
    io = 2 * (Bt * S * D * f32) * 2 + 2 * (Bt * S * S * bf16)   # x/out + bias (2x buffered)
    wbytes = 2 * sum(int(np.prod(w.shape[1:])) * w.dtype.itemsize for w in weights)
    inter = (Bt * S * (2 * hk + hv) * f32            # fused qkv
             + hb * S * (2 * d_k + d_v) * bf16       # packed q/k/v
             + 3 * hb * S * S * f32                  # scores, exp, tiled bias
             + hb * S * d_v * f32                    # ctx
             + Bt * S * hv * f32                     # ctx scratch
             + 2 * Bt * S * F * f32                  # FFN hidden
             + 3 * Bt * S * D * f32)                 # attn / y / out temporaries
    return io + wbytes + inter


def encoder_pallas(x, mask, layer_params, *, heads, d_k, d_v,
                   batch_block=None, target_rows=512, min_blocks=2):
    B, S, D = x.shape
    N = len(layer_params)
    F = layer_params[0]["w1"].shape[1]
    Bt = (batch_block if batch_block is not None
          else _pick_batch_block(B, S, target_rows, min_blocks))
    assert B % Bt == 0, "batch_block must divide batch"

    weights = _stack_params(layer_params)

    # Additive mask bias in bf16: 0 keep / -1e30 masked (mask: 1.0 == masked).
    bias = jnp.where(mask > 0.5, MASK_BIAS, 0.0).astype(jnp.bfloat16)

    def weight_spec(w):
        return pl.BlockSpec((1,) + w.shape[1:], lambda b, l: (l, 0, 0))

    in_specs = [
        pl.BlockSpec((Bt, S, D), lambda b, l: (b, 0, 0)),   # x (seed activation)
        pl.BlockSpec((Bt, S, S), lambda b, l: (b, 0, 0)),   # mask bias (resident)
    ] + [weight_spec(w) for w in weights]
    out_spec = pl.BlockSpec((Bt, S, D), lambda b, l: (b, 0, 0))

    kernel = functools.partial(encoder_kernel, Bt=Bt, S=S, D=D,
                               heads=heads, d_k=d_k, d_v=d_v)

    # Scoped-VMEM limit sized from the actual buffer budget (2x headroom),
    # clipped to the smallest physical VMEM across generations (64 MiB, v7x).
    est = _vmem_estimate_bytes(Bt, S, D, heads, d_k, d_v, F, weights)
    vmem_limit = int(min(64 * 2**20, max(16 * 2**20, 2 * est)))

    return pl.pallas_call(
        kernel,
        out_shape=jax.ShapeDtypeStruct((B, S, D), jnp.float32),
        grid_spec=pltpu.PrefetchScalarGridSpec(
            num_scalar_prefetch=0,
            grid=(B // Bt, N),        # batch blocks (parallel) x layers (sequential)
            in_specs=in_specs,
            out_specs=out_spec,
            scratch_shapes=[pltpu.VMEM((Bt, S, heads * d_v), jnp.float32)],
        ),
        compiler_params=pltpu.CompilerParams(
            dimension_semantics=("parallel", "arbitrary"),
            vmem_limit_bytes=vmem_limit),
    )(x, bias, *weights)


# ----------------------------------------------------------------------------
# Pure-JAX reference (mirrors the PyTorch forward, eval mode).  matmul_dtype
# selects the matmul-operand precision so the same function serves both as the
# f32-faithful spec and as a mixed-precision (bf16 operands, f32 accumulate)
# reference that matches the kernel's intentional MXU policy.
# ----------------------------------------------------------------------------
def _make_mm(dtype):
    def mm(a, b):
        return jnp.dot(a.astype(dtype), b.astype(dtype),
                       preferred_element_type=jnp.float32)
    return mm


def _cell_ref_single(x, mask, p, heads, d_k, d_v, mm):
    qf = mm(x, p["wq"]) + p["bq"]
    kf = mm(x, p["wk"]) + p["bk"]
    vf = mm(x, p["wv"]) + p["bv"]
    outs = []
    for h in range(heads):
        qh = qf[:, h * d_k:(h + 1) * d_k]
        kh = kf[:, h * d_k:(h + 1) * d_k]
        vh = vf[:, h * d_v:(h + 1) * d_v]
        s = mm(qh, kh.T) / math.sqrt(d_k)
        s = jnp.where(mask > 0.5, -jnp.inf, s)
        s = jax.nn.softmax(s, axis=-1)
        outs.append(mm(s, vh))
    attn = mm(jnp.concatenate(outs, axis=-1), p["wout"]) + p["bout"]
    y = _layer_norm(x + attn, p["g1"], p["be1"])
    h1 = jnp.maximum(mm(y, p["w1"]) + p["b1"], 0.0)
    h2 = jnp.maximum(mm(h1, p["w2"]) + p["b2"], 0.0)
    return _layer_norm(h2 + y, p["g2"], p["be2"])


def encoder_ref(x, mask, layer_params, *, heads, d_k, d_v,
                matmul_dtype=jnp.float32):
    mm = _make_mm(matmul_dtype)
    for p in layer_params:
        f = lambda xb, mb: _cell_ref_single(xb, mb, p, heads, d_k, d_v, mm)
        x = jax.vmap(f)(x, mask)
    return x


# ----------------------------------------------------------------------------
# Deterministic parameter init (weights stored as (in, out) == torch W.T)
# ----------------------------------------------------------------------------
def init_layer_params(key, D, heads, d_k, d_v, F):
    ks = jax.random.split(key, 12)

    def lin(k, fan_in, fan_out):
        kw, kb = jax.random.split(k)
        w = jax.random.normal(kw, (fan_in, fan_out), jnp.float32) / math.sqrt(fan_in)
        b = 0.01 * jax.random.normal(kb, (1, fan_out), jnp.float32)
        return w, b

    wq, bq = lin(ks[0], D, heads * d_k)
    wk, bk = lin(ks[1], D, heads * d_k)
    wv, bv = lin(ks[2], D, heads * d_v)
    wout, bout = lin(ks[3], heads * d_v, D)
    w1, b1 = lin(ks[4], D, F)
    w2, b2 = lin(ks[5], F, D)
    g1 = 1.0 + 0.01 * jax.random.normal(ks[6], (1, D), jnp.float32)
    be1 = 0.01 * jax.random.normal(ks[7], (1, D), jnp.float32)
    g2 = 1.0 + 0.01 * jax.random.normal(ks[8], (1, D), jnp.float32)
    be2 = 0.01 * jax.random.normal(ks[9], (1, D), jnp.float32)
    return dict(wq=wq, bq=bq, wk=wk, bk=bk, wv=wv, bv=bv,
                wout=wout, bout=bout, g1=g1, be1=be1,
                w1=w1, b1=b1, w2=w2, b2=b2, g2=g2, be2=be2)


# ----------------------------------------------------------------------------
if __name__ == "__main__":
    # Small config: N=2 layers, 4 heads, d_model=32, d_k=d_v=8, ff=64
    N, heads, D, d_k, d_v, F = 2, 4, 32, 8, 8, 64
    B, S = 2, 8

    root = jax.random.PRNGKey(0)
    kx, kparams = jax.random.split(root)
    x = jax.random.normal(kx, (B, S, D), jnp.float32)

    # causal mask: 1.0 where future position (masked), broadcast over batch
    causal = (jnp.arange(S)[None, :] > jnp.arange(S)[:, None]).astype(jnp.float32)
    mask = jnp.broadcast_to(causal, (B, S, S))

    layer_keys = jax.random.split(kparams, N)
    layer_params = [init_layer_params(k, D, heads, d_k, d_v, F) for k in layer_keys]

    out = jax.block_until_ready(
        encoder_pallas(x, mask, layer_params, heads=heads, d_k=d_k, d_v=d_v))

    # (1) Tight check against a reference using the SAME mixed-precision
    #     matmul policy as the kernel (bf16 MXU operands, f32 accumulation):
    #     this isolates kernel/tiling correctness from the intentional
    #     precision choice.
    ref_bf16 = jax.block_until_ready(
        encoder_ref(x, mask, layer_params, heads=heads, d_k=d_k, d_v=d_v,
                    matmul_dtype=jnp.bfloat16))
    np.testing.assert_allclose(np.asarray(out), np.asarray(ref_bf16),
                               rtol=3e-2, atol=3e-2)

    # (2) Sanity check against the full-f32 reference (faithful to the
    #     PyTorch module); the residual gap is the bf16 MXU-operand policy.
    ref_f32 = jax.block_until_ready(
        encoder_ref(x, mask, layer_params, heads=heads, d_k=d_k, d_v=d_v,
                    matmul_dtype=jnp.float32))
    np.testing.assert_allclose(np.asarray(out), np.asarray(ref_f32),
                               rtol=1e-1, atol=1e-1)

    print("KERNEL_OK")
</pallas_src>

<mosaic_0001>
module attributes {stable_mosaic.version = 11 : i64} {
  func.func @encoder_kernel(%arg0: i32, %arg1: i32, %arg2: memref<1x8x32xf32, #tpu.memory_space<vmem>>, %arg3: memref<1x8x8xbf16, #tpu.memory_space<vmem>>, %arg4: memref<1x32x96xbf16, #tpu.memory_space<vmem>>, %arg5: memref<1x1x96xf32, #tpu.memory_space<vmem>>, %arg6: memref<1x32x32xbf16, #tpu.memory_space<vmem>>, %arg7: memref<1x1x32xf32, #tpu.memory_space<vmem>>, %arg8: memref<1x1x32xf32, #tpu.memory_space<vmem>>, %arg9: memref<1x1x32xf32, #tpu.memory_space<vmem>>, %arg10: memref<1x32x64xbf16, #tpu.memory_space<vmem>>, %arg11: memref<1x1x64xf32, #tpu.memory_space<vmem>>, %arg12: memref<1x64x32xbf16, #tpu.memory_space<vmem>>, %arg13: memref<1x1x32xf32, #tpu.memory_space<vmem>>, %arg14: memref<1x1x32xf32, #tpu.memory_space<vmem>>, %arg15: memref<1x1x32xf32, #tpu.memory_space<vmem>>, %arg16: memref<1x8x32xf32, #tpu.memory_space<vmem>>, %arg17: memref<1x8x32xf32, #tpu.memory_space<vmem>>) attributes {dimension_semantics = [#tpu.dimension_semantics<parallel>, #tpu.dimension_semantics<arbitrary>], iteration_bounds = array<i64: 2, 2>, scalar_prefetch = 0 : i64, scratch_operands = 1 : i64, tpu.core_type = #tpu.core_type<tc>, window_params = [{transform_indices = @transform_0, window_bounds = array<i64: 1, 8, 32>}, {transform_indices = @transform_1, window_bounds = array<i64: 1, 8, 8>}, {transform_indices = @transform_2, window_bounds = array<i64: 1, 32, 96>}, {transform_indices = @transform_3, window_bounds = array<i64: 1, 1, 96>}, {transform_indices = @transform_4, window_bounds = array<i64: 1, 32, 32>}, {transform_indices = @transform_5, window_bounds = array<i64: 1, 1, 32>}, {transform_indices = @transform_6, window_bounds = array<i64: 1, 1, 32>}, {transform_indices = @transform_7, window_bounds = array<i64: 1, 1, 32>}, {transform_indices = @transform_8, window_bounds = array<i64: 1, 32, 64>}, {transform_indices = @transform_9, window_bounds = array<i64: 1, 1, 64>}, {transform_indices = @transform_10, window_bounds = array<i64: 1, 64, 32>}, {transform_indices = @transform_11, window_bounds = array<i64: 1, 1, 32>}, {transform_indices = @transform_12, window_bounds = array<i64: 1, 1, 32>}, {transform_indices = @transform_13, window_bounds = array<i64: 1, 1, 32>}, {transform_indices = @transform_14, window_bounds = array<i64: 1, 8, 32>}]} {
    %c0_i32 = arith.constant 0 : i32
    %0 = arith.cmpi eq, %arg1, %c0_i32 : i32
    %1 = arith.extui %0 : i1 to i32
    %c0_i32_0 = arith.constant 0 : i32
    %2 = arith.cmpi ne, %1, %c0_i32_0 : i32
    scf.if %2 {
      %c0_77 = arith.constant 0 : index
      %c0_78 = arith.constant 0 : index
      %c0_79 = arith.constant 0 : index
      %167 = vector.load %arg2[%c0_77, %c0_78, %c0_79] : memref<1x8x32xf32, #tpu.memory_space<vmem>>, vector<1x8x32xf32>
      %c0_80 = arith.constant 0 : index
      %c0_81 = arith.constant 0 : index
      %c0_82 = arith.constant 0 : index
      %168 = vector.load %arg16[%c0_80, %c0_81, %c0_82] : memref<1x8x32xf32, #tpu.memory_space<vmem>>, vector<1x8x32xf32>
      tpu.vector_store %arg16[%c0_80, %c0_81, %c0_82], %167 {strides = array<i32>} : memref<1x8x32xf32, #tpu.memory_space<vmem>>, vector<1x8x32xf32>,
    } else {
    }
    %c0 = arith.constant 0 : index
    %c0_1 = arith.constant 0 : index
    %c0_2 = arith.constant 0 : index
    %3 = vector.load %arg16[%c0, %c0_1, %c0_2] : memref<1x8x32xf32, #tpu.memory_space<vmem>>, vector<1x8x32xf32>
    %4 = vector.shape_cast %3 : vector<1x8x32xf32> to vector<8x32xf32>
    %5 = arith.truncf %4 : vector<8x32xf32> to vector<8x32xbf16>
    %c0_3 = arith.constant 0 : index
    %c0_4 = arith.constant 0 : index
    %c0_5 = arith.constant 0 : index
    %6 = vector.load %arg4[%c0_3, %c0_4, %c0_5] : memref<1x32x96xbf16, #tpu.memory_space<vmem>>, vector<1x32x96xbf16>
    %7 = vector.shape_cast %6 : vector<1x32x96xbf16> to vector<32x96xbf16>
    %cst = arith.constant dense<0.000000e+00> : vector<8x96xf32>
    %8 = tpu.matmul %5, %7, %cst {dimension_numbers = #tpu.dot_dimension_numbers<[1], [0], [0], [1], [0, 0, 1, 1], [], []>} : vector<8x32xbf16>, vector<32x96xbf16>, vector<8x96xf32> -> vector<8x96xf32>
    %c0_6 = arith.constant 0 : index
    %c0_7 = arith.constant 0 : index
    %c0_8 = arith.constant 0 : index
    %9 = vector.load %arg5[%c0_6, %c0_7, %c0_8] : memref<1x1x96xf32, #tpu.memory_space<vmem>>, vector<1x1x96xf32>
    %10 = vector.shape_cast %9 : vector<1x1x96xf32> to vector<1x96xf32>
    %11 = vector.broadcast %10 : vector<1x96xf32> to vector<8x96xf32>
    %12 = arith.addf %8, %11 : vector<8x96xf32>
    %13 = vector.extract_strided_slice %12 {offsets = [0, 0], sizes = [8, 32], strides = [1, 1]} : vector<8x96xf32> to vector<8x32xf32>
    %cst_9 = arith.constant 0.353553385 : f32
    %14 = vector.broadcast %cst_9 : f32 to vector<8x32xf32>
    %15 = arith.mulf %13, %14 : vector<8x32xf32>
    %16 = vector.extract_strided_slice %12 {offsets = [0, 32], sizes = [8, 32], strides = [1, 1]} : vector<8x96xf32> to vector<8x32xf32>
    %17 = vector.extract_strided_slice %12 {offsets = [0, 64], sizes = [8, 32], strides = [1, 1]} : vector<8x96xf32> to vector<8x32xf32>
    %18 = vector.extract_strided_slice %15 {offsets = [0, 0], sizes = [8, 8], strides = [1, 1]} : vector<8x32xf32> to vector<8x8xf32>
    %19 = vector.shape_cast %18 : vector<8x8xf32> to vector<1x1x8x8xf32>
    %20 = vector.extract_strided_slice %15 {offsets = [0, 8], sizes = [8, 8], strides = [1, 1]} : vector<8x32xf32> to vector<8x8xf32>
    %21 = vector.shape_cast %20 : vector<8x8xf32> to vector<1x1x8x8xf32>
    %22 = vector.extract_strided_slice %15 {offsets = [0, 16], sizes = [8, 8], strides = [1, 1]} : vector<8x32xf32> to vector<8x8xf32>
    %23 = vector.shape_cast %22 : vector<8x8xf32> to vector<1x1x8x8xf32>
    %24 = vector.extract_strided_slice %15 {offsets = [0, 24], sizes = [8, 8], strides = [1, 1]} : vector<8x32xf32> to vector<8x8xf32>
    %25 = vector.shape_cast %24 : vector<8x8xf32> to vector<1x1x8x8xf32>
    %26 = tpu.concatenate %19, %21, %23, %25 in 0 : vector<1x1x8x8xf32>, vector<1x1x8x8xf32>, vector<1x1x8x8xf32>, vector<1x1x8x8xf32> -> vector<4x1x8x8xf32>
    %27 = vector.shape_cast %26 : vector<4x1x8x8xf32> to vector<4x8x8xf32>
    %28 = arith.truncf %27 : vector<4x8x8xf32> to vector<4x8x8xbf16>
    %29 = vector.extract_strided_slice %16 {offsets = [0, 0], sizes = [8, 8], strides = [1, 1]} : vector<8x32xf32> to vector<8x8xf32>
    %30 = vector.shape_cast %29 : vector<8x8xf32> to vector<1x1x8x8xf32>
    %31 = vector.extract_strided_slice %16 {offsets = [0, 8], sizes = [8, 8], strides = [1, 1]} : vector<8x32xf32> to vector<8x8xf32>
    %32 = vector.shape_cast %31 : vector<8x8xf32> to vector<1x1x8x8xf32>
    %33 = vector.extract_strided_slice %16 {offsets = [0, 16], sizes = [8, 8], strides = [1, 1]} : vector<8x32xf32> to vector<8x8xf32>
    %34 = vector.shape_cast %33 : vector<8x8xf32> to vector<1x1x8x8xf32>
    %35 = vector.extract_strided_slice %16 {offsets = [0, 24], sizes = [8, 8], strides = [1, 1]} : vector<8x32xf32> to vector<8x8xf32>
    %36 = vector.shape_cast %35 : vector<8x8xf32> to vector<1x1x8x8xf32>
    %37 = tpu.concatenate %30, %32, %34, %36 in 0 : vector<1x1x8x8xf32>, vector<1x1x8x8xf32>, vector<1x1x8x8xf32>, vector<1x1x8x8xf32> -> vector<4x1x8x8xf32>
    %38 = vector.shape_cast %37 : vector<4x1x8x8xf32> to vector<4x8x8xf32>
    %39 = arith.truncf %38 : vector<4x8x8xf32> to vector<4x8x8xbf16>
    %40 = vector.extract_strided_slice %17 {offsets = [0, 0], sizes = [8, 8], strides = [1, 1]} : vector<8x32xf32> to vector<8x8xf32>
    %41 = vector.shape_cast %40 : vector<8x8xf32> to vector<1x1x8x8xf32>
    %42 = vector.extract_strided_slice %17 {offsets = [0, 8], sizes = [8, 8], strides = [1, 1]} : vector<8x32xf32> to vector<8x8xf32>
    %43 = vector.shape_cast %42 : vector<8x8xf32> to vector<1x1x8x8xf32>
    %44 = vector.extract_strided_slice %17 {offsets = [0, 16], sizes = [8, 8], strides = [1, 1]} : vector<8x32xf32> to vector<8x8xf32>
    %45 = vector.shape_cast %44 : vector<8x8xf32> to vector<1x1x8x8xf32>
    %46 = vector.extract_strided_slice %17 {offsets = [0, 24], sizes = [8, 8], strides = [1, 1]} : vector<8x32xf32> to vector<8x8xf32>
    %47 = vector.shape_cast %46 : vector<8x8xf32> to vector<1x1x8x8xf32>
    %48 = tpu.concatenate %41, %43, %45, %47 in 0 : vector<1x1x8x8xf32>, vector<1x1x8x8xf32>, vector<1x1x8x8xf32>, vector<1x1x8x8xf32> -> vector<4x1x8x8xf32>
    %49 = vector.shape_cast %48 : vector<4x1x8x8xf32> to vector<4x8x8xf32>
    %50 = arith.truncf %49 : vector<4x8x8xf32> to vector<4x8x8xbf16>
    "tpu.trace_start"() <{level = 10 : i32, message = "bqd,bkd->bqk"}> : () -> ()
    %cst_10 = arith.constant dense<0.000000e+00> : vector<4x8x8xf32>
    %51 = tpu.matmul %28, %39, %cst_10 {dimension_numbers = #tpu.dot_dimension_numbers<[2], [2], [1], [1], [0, 0, 0, 1, 1, 1], [0], [0]>} : vector<4x8x8xbf16>, vector<4x8x8xbf16>, vector<4x8x8xf32> -> vector<4x8x8xf32>
    "tpu.trace_stop"() : () -> ()
    %c0_11 = arith.constant 0 : index
    %c0_12 = arith.constant 0 : index
    %c0_13 = arith.constant 0 : index
    %52 = vector.load %arg3[%c0_11, %c0_12, %c0_13] : memref<1x8x8xbf16, #tpu.memory_space<vmem>>, vector<1x8x8xbf16>
    %53 = arith.extf %52 : vector<1x8x8xbf16> to vector<1x8x8xf32>
    %54 = tpu.concatenate %53, %53, %53, %53 in 0 : vector<1x8x8xf32>, vector<1x8x8xf32>, vector<1x8x8xf32>, vector<1x8x8xf32> -> vector<4x8x8xf32>
    %55 = arith.addf %51, %54 : vector<4x8x8xf32>
    %cst_14 = arith.constant dense<0xFF800000> : vector<4x8xf32>
    %56 = vector.multi_reduction <maximumf>, %55, %cst_14 [2] : vector<4x8x8xf32> to vector<4x8xf32>
    %57 = vector.shape_cast %56 : vector<4x8xf32> to vector<4x8x1xf32>
    %58 = vector.broadcast %57 : vector<4x8x1xf32> to vector<4x8x8xf32>
    %59 = arith.subf %55, %58 : vector<4x8x8xf32>
    %60 = math.exp %59 : vector<4x8x8xf32>
    %cst_15 = arith.constant dense<0.000000e+00> : vector<4x8xf32>
    %61 = vector.multi_reduction <add>, %60, %cst_15 [2] : vector<4x8x8xf32> to vector<4x8xf32>
    %62 = vector.shape_cast %61 : vector<4x8xf32> to vector<4x8x1xf32>
    %63 = arith.truncf %60 : vector<4x8x8xf32> to vector<4x8x8xbf16>
    "tpu.trace_start"() <{level = 10 : i32, message = "bqk,bkd->bqd"}> : () -> ()
    %cst_16 = arith.constant dense<0.000000e+00> : vector<4x8x8xf32>
    %64 = tpu.matmul %63, %50, %cst_16 {dimension_numbers = #tpu.dot_dimension_numbers<[2], [1], [1], [2], [0, 0, 0, 1, 1, 2], [0], [0]>} : vector<4x8x8xbf16>, vector<4x8x8xbf16>, vector<4x8x8xf32> -> vector<4x8x8xf32>
    "tpu.trace_stop"() : () -> ()
    %65 = tpu.reciprocal %62 : vector<4x8x1xf32> -> vector<4x8x1xf32>
    %66 = vector.broadcast %65 : vector<4x8x1xf32> to vector<4x8x8xf32>
    %67 = arith.mulf %64, %66 : vector<4x8x8xf32>
    %68 = vector.shape_cast %67 : vector<4x8x8xf32> to vector<4x1x8x8xf32>
    %69 = vector.extract_strided_slice %68 {offsets = [0, 0, 0, 0], sizes = [1, 1, 8, 8], strides = [1, 1, 1, 1]} : vector<4x1x8x8xf32> to vector<1x1x8x8xf32>
    %70 = vector.shape_cast %69 : vector<1x1x8x8xf32> to vector<1x8x8xf32>
    %c0_17 = arith.constant 0 : index
    %c0_18 = arith.constant 0 : index
    %c0_19 = arith.constant 0 : index
    %71 = vector.load %arg17[%c0_17, %c0_18, %c0_19] : memref<1x8x32xf32, #tpu.memory_space<vmem>>, vector<1x8x8xf32>
    tpu.vector_store %arg17[%c0_17, %c0_18, %c0_19], %70 {strides = array<i32>} : memref<1x8x32xf32, #tpu.memory_space<vmem>>, vector<1x8x8xf32>,
    %72 = vector.extract_strided_slice %68 {offsets = [1, 0, 0, 0], sizes = [1, 1, 8, 8], strides = [1, 1, 1, 1]} : vector<4x1x8x8xf32> to vector<1x1x8x8xf32>
    %73 = vector.shape_cast %72 : vector<1x1x8x8xf32> to vector<1x8x8xf32>
    %c0_20 = arith.constant 0 : index
    %c0_21 = arith.constant 0 : index
    %c8 = arith.constant 8 : index
    %74 = vector.load %arg17[%c0_20, %c0_21, %c8] : memref<1x8x32xf32, #tpu.memory_space<vmem>>, vector<1x8x8xf32>
    tpu.vector_store %arg17[%c0_20, %c0_21, %c8], %73 {strides = array<i32>} : memref<1x8x32xf32, #tpu.memory_space<vmem>>, vector<1x8x8xf32>,
    %75 = vector.extract_strided_slice %68 {offsets = [2, 0, 0, 0], sizes = [1, 1, 8, 8], strides = [1, 1, 1, 1]} : vector<4x1x8x8xf32> to vector<1x1x8x8xf32>
    %76 = vector.shape_cast %75 : vector<1x1x8x8xf32> to vector<1x8x8xf32>
    %c0_22 = arith.constant 0 : index
    %c0_23 = arith.constant 0 : index
    %c16 = arith.constant 16 : index
    %77 = vector.load %arg17[%c0_22, %c0_23, %c16] : memref<1x8x32xf32, #tpu.memory_space<vmem>>, vector<1x8x8xf32>
    tpu.vector_store %arg17[%c0_22, %c0_23, %c16], %76 {strides = array<i32>} : memref<1x8x32xf32, #tpu.memory_space<vmem>>, vector<1x8x8xf32>,
    %78 = vector.extract_strided_slice %68 {offsets = [3, 0, 0, 0], sizes = [1, 1, 8, 8], strides = [1, 1, 1, 1]} : vector<4x1x8x8xf32> to vector<1x1x8x8xf32>
    %79 = vector.shape_cast %78 : vector<1x1x8x8xf32> to vector<1x8x8xf32>
    %c0_24 = arith.constant 0 : index
    %c0_25 = arith.constant 0 : index
    %c24 = arith.constant 24 : index
    %80 = vector.load %arg17[%c0_24, %c0_25, %c24] : memref<1x8x32xf32, #tpu.memory_space<vmem>>, vector<1x8x8xf32>
    tpu.vector_store %arg17[%c0_24, %c0_25, %c24], %79 {strides = array<i32>} : memref<1x8x32xf32, #tpu.memory_space<vmem>>, vector<1x8x8xf32>,
    %c0_26 = arith.constant 0 : index
    %c0_27 = arith.constant 0 : index
    %c0_28 = arith.constant 0 : index
    %81 = vector.load %arg17[%c0_26, %c0_27, %c0_28] : memref<1x8x32xf32, #tpu.memory_space<vmem>>, vector<1x8x32xf32>
    %82 = vector.shape_cast %81 : vector<1x8x32xf32> to vector<8x32xf32>
    %83 = arith.truncf %82 : vector<8x32xf32> to vector<8x32xbf16>
    %c0_29 = arith.constant 0 : index
    %c0_30 = arith.constant 0 : index
    %c0_31 = arith.constant 0 : index
    %84 = vector.load %arg6[%c0_29, %c0_30, %c0_31] : memref<1x32x32xbf16, #tpu.memory_space<vmem>>, vector<1x32x32xbf16>
    %85 = vector.shape_cast %84 : vector<1x32x32xbf16> to vector<32x32xbf16>
    %cst_32 = arith.constant dense<0.000000e+00> : vector<8x32xf32>
    %86 = tpu.matmul %83, %85, %cst_32 {dimension_numbers = #tpu.dot_dimension_numbers<[1], [0], [0], [1], [0, 0, 1, 1], [], []>} : vector<8x32xbf16>, vector<32x32xbf16>, vector<8x32xf32> -> vector<8x32xf32>
    %c0_33 = arith.constant 0 : index
    %c0_34 = arith.constant 0 : index
    %c0_35 = arith.constant 0 : index
    %87 = vector.load %arg7[%c0_33, %c0_34, %c0_35] : memref<1x1x32xf32, #tpu.memory_space<vmem>>, vector<1x1x32xf32>
    %88 = vector.shape_cast %87 : vector<1x1x32xf32> to vector<1x32xf32>
    %89 = vector.broadcast %88 : vector<1x32xf32> to vector<8x32xf32>
    %90 = arith.addf %86, %89 : vector<8x32xf32>
    %91 = arith.addf %4, %90 : vector<8x32xf32>
    %c0_36 = arith.constant 0 : index
    %c0_37 = arith.constant 0 : index
    %c0_38 = arith.constant 0 : index
    %92 = vector.load %arg8[%c0_36, %c0_37, %c0_38] : memref<1x1x32xf32, #tpu.memory_space<vmem>>, vector<1x1x32xf32>
    %93 = vector.shape_cast %92 : vector<1x1x32xf32> to vector<1x32xf32>
    %c0_39 = arith.constant 0 : index
    %c0_40 = arith.constant 0 : index
    %c0_41 = arith.constant 0 : index
    %94 = vector.load %arg9[%c0_39, %c0_40, %c0_41] : memref<1x1x32xf32, #tpu.memory_space<vmem>>, vector<1x1x32xf32>
    %95 = vector.shape_cast %94 : vector<1x1x32xf32> to vector<1x32xf32>
    %cst_42 = arith.constant dense<0.000000e+00> : vector<8xf32>
    %96 = vector.multi_reduction <add>, %91, %cst_42 [1] : vector<8x32xf32> to vector<8xf32>
    %97 = vector.shape_cast %96 : vector<8xf32> to vector<8x1xf32>
    %cst_43 = arith.constant 3.200000e+01 : f32
    %98 = vector.broadcast %cst_43 : f32 to vector<8x1xf32>
    %99 = arith.divf %97, %98 : vector<8x1xf32>
    %100 = vector.broadcast %99 : vector<8x1xf32> to vector<8x32xf32>
    %101 = arith.subf %91, %100 : vector<8x32xf32>
    %102 = arith.mulf %101, %101 : vector<8x32xf32>
    %cst_44 = arith.constant dense<0.000000e+00> : vector<8xf32>
    %103 = vector.multi_reduction <add>, %102, %cst_44 [1] : vector<8x32xf32> to vector<8xf32>
    %104 = vector.shape_cast %103 : vector<8xf32> to vector<8x1xf32>
    %cst_45 = arith.constant 3.200000e+01 : f32
    %105 = vector.broadcast %cst_45 : f32 to vector<8x1xf32>
    %106 = arith.divf %104, %105 : vector<8x1xf32>
    %107 = vector.broadcast %99 : vector<8x1xf32> to vector<8x32xf32>
    %108 = arith.subf %91, %107 : vector<8x32xf32>
    %cst_46 = arith.constant 9.99999997E-7 : f32
    %109 = vector.broadcast %cst_46 : f32 to vector<8x1xf32>
    %110 = arith.addf %106, %109 : vector<8x1xf32>
    %111 = math.rsqrt %110 : vector<8x1xf32>
    %112 = vector.broadcast %111 : vector<8x1xf32> to vector<8x32xf32>
    %113 = arith.mulf %108, %112 : vector<8x32xf32>
    %114 = vector.broadcast %93 : vector<1x32xf32> to vector<8x32xf32>
    %115 = arith.mulf %113, %114 : vector<8x32xf32>
    %116 = vector.broadcast %95 : vector<1x32xf32> to vector<8x32xf32>
    %117 = arith.addf %115, %116 : vector<8x32xf32>
    %118 = arith.truncf %117 : vector<8x32xf32> to vector<8x32xbf16>
    %c0_47 = arith.constant 0 : index
    %c0_48 = arith.constant 0 : index
    %c0_49 = arith.constant 0 : index
    %119 = vector.load %arg10[%c0_47, %c0_48, %c0_49] : memref<1x32x64xbf16, #tpu.memory_space<vmem>>, vector<1x32x64xbf16>
    %120 = vector.shape_cast %119 : vector<1x32x64xbf16> to vector<32x64xbf16>
    %cst_50 = arith.constant dense<0.000000e+00> : vector<8x64xf32>
    %121 = tpu.matmul %118, %120, %cst_50 {dimension_numbers = #tpu.dot_dimension_numbers<[1], [0], [0], [1], [0, 0, 1, 1], [], []>} : vector<8x32xbf16>, vector<32x64xbf16>, vector<8x64xf32> -> vector<8x64xf32>
    %c0_51 = arith.constant 0 : index
    %c0_52 = arith.constant 0 : index
    %c0_53 = arith.constant 0 : index
    %122 = vector.load %arg11[%c0_51, %c0_52, %c0_53] : memref<1x1x64xf32, #tpu.memory_space<vmem>>, vector<1x1x64xf32>
    %123 = vector.shape_cast %122 : vector<1x1x64xf32> to vector<1x64xf32>
    %124 = vector.broadcast %123 : vector<1x64xf32> to vector<8x64xf32>
    %125 = arith.addf %121, %124 : vector<8x64xf32>
    %cst_54 = arith.constant 0.000000e+00 : f32
    %126 = vector.broadcast %cst_54 : f32 to vector<8x64xf32>
    %127 = arith.maximumf %125, %126 : vector<8x64xf32>
    %128 = arith.truncf %127 : vector<8x64xf32> to vector<8x64xbf16>
    %c0_55 = arith.constant 0 : index
    %c0_56 = arith.constant 0 : index
    %c0_57 = arith.constant 0 : index
    %129 = vector.load %arg12[%c0_55, %c0_56, %c0_57] : memref<1x64x32xbf16, #tpu.memory_space<vmem>>, vector<1x64x32xbf16>
    %130 = vector.shape_cast %129 : vector<1x64x32xbf16> to vector<64x32xbf16>
    %cst_58 = arith.constant dense<0.000000e+00> : vector<8x32xf32>
    %131 = tpu.matmul %128, %130, %cst_58 {dimension_numbers = #tpu.dot_dimension_numbers<[1], [0], [0], [1], [0, 0, 1, 1], [], []>} : vector<8x64xbf16>, vector<64x32xbf16>, vector<8x32xf32> -> vector<8x32xf32>
    %c0_59 = arith.constant 0 : index
    %c0_60 = arith.constant 0 : index
    %c0_61 = arith.constant 0 : index
    %132 = vector.load %arg13[%c0_59, %c0_60, %c0_61] : memref<1x1x32xf32, #tpu.memory_space<vmem>>, vector<1x1x32xf32>
    %133 = vector.shape_cast %132 : vector<1x1x32xf32> to vector<1x32xf32>
    %134 = vector.broadcast %133 : vector<1x32xf32> to vector<8x32xf32>
    %135 = arith.addf %131, %134 : vector<8x32xf32>
    %cst_62 = arith.constant 0.000000e+00 : f32
    %136 = vector.broadcast %cst_62 : f32 to vector<8x32xf32>
    %137 = arith.maximumf %135, %136 : vector<8x32xf32>
    %138 = arith.addf %137, %117 : vector<8x32xf32>
    %c0_63 = arith.constant 0 : index
    %c0_64 = arith.constant 0 : index
    %c0_65 = arith.constant 0 : index
    %139 = vector.load %arg14[%c0_63, %c0_64, %c0_65] : memref<1x1x32xf32, #tpu.memory_space<vmem>>, vector<1x1x32xf32>
    %140 = vector.shape_cast %139 : vector<1x1x32xf32> to vector<1x32xf32>
    %c0_66 = arith.constant 0 : index
    %c0_67 = arith.constant 0 : index
    %c0_68 = arith.constant 0 : index
    %141 = vector.load %arg15[%c0_66, %c0_67, %c0_68] : memref<1x1x32xf32, #tpu.memory_space<vmem>>, vector<1x1x32xf32>
    %142 = vector.shape_cast %141 : vector<1x1x32xf32> to vector<1x32xf32>
    %cst_69 = arith.constant dense<0.000000e+00> : vector<8xf32>
    %143 = vector.multi_reduction <add>, %138, %cst_69 [1] : vector<8x32xf32> to vector<8xf32>
    %144 = vector.shape_cast %143 : vector<8xf32> to vector<8x1xf32>
    %cst_70 = arith.constant 3.200000e+01 : f32
    %145 = vector.broadcast %cst_70 : f32 to vector<8x1xf32>
    %146 = arith.divf %144, %145 : vector<8x1xf32>
    %147 = vector.broadcast %146 : vector<8x1xf32> to vector<8x32xf32>
    %148 = arith.subf %138, %147 : vector<8x32xf32>
    %149 = arith.mulf %148, %148 : vector<8x32xf32>
    %cst_71 = arith.constant dense<0.000000e+00> : vector<8xf32>
    %150 = vector.multi_reduction <add>, %149, %cst_71 [1] : vector<8x32xf32> to vector<8xf32>
    %151 = vector.shape_cast %150 : vector<8xf32> to vector<8x1xf32>
    %cst_72 = arith.constant 3.200000e+01 : f32
    %152 = vector.broadcast %cst_72 : f32 to vector<8x1xf32>
    %153 = arith.divf %151, %152 : vector<8x1xf32>
    %154 = vector.broadcast %146 : vector<8x1xf32> to vector<8x32xf32>
    %155 = arith.subf %138, %154 : vector<8x32xf32>
    %cst_73 = arith.constant 9.99999997E-7 : f32
    %156 = vector.broadcast %cst_73 : f32 to vector<8x1xf32>
    %157 = arith.addf %153, %156 : vector<8x1xf32>
    %158 = math.rsqrt %157 : vector<8x1xf32>
    %159 = vector.broadcast %158 : vector<8x1xf32> to vector<8x32xf32>
    %160 = arith.mulf %155, %159 : vector<8x32xf32>
    %161 = vector.broadcast %140 : vector<1x32xf32> to vector<8x32xf32>
    %162 = arith.mulf %160, %161 : vector<8x32xf32>
    %163 = vector.broadcast %142 : vector<1x32xf32> to vector<8x32xf32>
    %164 = arith.addf %162, %163 : vector<8x32xf32>
    %165 = vector.shape_cast %164 : vector<8x32xf32> to vector<1x8x32xf32>
    %c0_74 = arith.constant 0 : index
    %c0_75 = arith.constant 0 : index
    %c0_76 = arith.constant 0 : index
    %166 = vector.load %arg16[%c0_74, %c0_75, %c0_76] : memref<1x8x32xf32, #tpu.memory_space<vmem>>, vector<1x8x32xf32>
    tpu.vector_store %arg16[%c0_74, %c0_75, %c0_76], %165 {strides = array<i32>} : memref<1x8x32xf32, #tpu.memory_space<vmem>>, vector<1x8x32xf32>,
    return
  }
  func.func @transform_0(%arg0: i32, %arg1: i32) -> (i32, i32, i32) {
    %c0_i32 = arith.constant 0 : i32
    %c0_i32_0 = arith.constant 0 : i32
    %c0_i32_1 = arith.constant 0 : i32
    return %arg0, %c0_i32, %c0_i32_0 : i32, i32, i32
  }
  func.func @transform_1(%arg0: i32, %arg1: i32) -> (i32, i32, i32) {
    %c0_i32 = arith.constant 0 : i32
    %c0_i32_0 = arith.constant 0 : i32
    %c0_i32_1 = arith.constant 0 : i32
    return %arg0, %c0_i32, %c0_i32_0 : i32, i32, i32
  }
  func.func @transform_2(%arg0: i32, %arg1: i32) -> (i32, i32, i32) {
    %c0_i32 = arith.constant 0 : i32
    %c0_i32_0 = arith.constant 0 : i32
    %c0_i32_1 = arith.constant 0 : i32
    return %arg1, %c0_i32, %c0_i32_0 : i32, i32, i32
  }
  func.func @transform_3(%arg0: i32, %arg1: i32) -> (i32, i32, i32) {
    %c0_i32 = arith.constant 0 : i32
    %c0_i32_0 = arith.constant 0 : i32
    %c0_i32_1 = arith.constant 0 : i32
    return %arg1, %c0_i32, %c0_i32_0 : i32, i32, i32
  }
  func.func @transform_4(%arg0: i32, %arg1: i32) -> (i32, i32, i32) {
    %c0_i32 = arith.constant 0 : i32
    %c0_i32_0 = arith.constant 0 : i32
    %c0_i32_1 = arith.constant 0 : i32
    return %arg1, %c0_i32, %c0_i32_0 : i32, i32, i32
  }
  func.func @transform_5(%arg0: i32, %arg1: i32) -> (i32, i32, i32) {
    %c0_i32 = arith.constant 0 : i32
    %c0_i32_0 = arith.constant 0 : i32
    %c0_i32_1 = arith.constant 0 : i32
    return %arg1, %c0_i32, %c0_i32_0 : i32, i32, i32
  }
  func.func @transform_6(%arg0: i32, %arg1: i32) -> (i32, i32, i32) {
    %c0_i32 = arith.constant 0 : i32
    %c0_i32_0 = arith.constant 0 : i32
    %c0_i32_1 = arith.constant 0 : i32
    return %arg1, %c0_i32, %c0_i32_0 : i32, i32, i32
  }
  func.func @transform_7(%arg0: i32, %arg1: i32) -> (i32, i32, i32) {
    %c0_i32 = arith.constant 0 : i32
    %c0_i32_0 = arith.constant 0 : i32
    %c0_i32_1 = arith.constant 0 : i32
    return %arg1, %c0_i32, %c0_i32_0 : i32, i32, i32
  }
  func.func @transform_8(%arg0: i32, %arg1: i32) -> (i32, i32, i32) {
    %c0_i32 = arith.constant 0 : i32
    %c0_i32_0 = arith.constant 0 : i32
    %c0_i32_1 = arith.constant 0 : i32
    return %arg1, %c0_i32, %c0_i32_0 : i32, i32, i32
  }
  func.func @transform_9(%arg0: i32, %arg1: i32) -> (i32, i32, i32) {
    %c0_i32 = arith.constant 0 : i32
    %c0_i32_0 = arith.constant 0 : i32
    %c0_i32_1 = arith.constant 0 : i32
    return %arg1, %c0_i32, %c0_i32_0 : i32, i32, i32
  }
  func.func @transform_10(%arg0: i32, %arg1: i32) -> (i32, i32, i32) {
    %c0_i32 = arith.constant 0 : i32
    %c0_i32_0 = arith.constant 0 : i32
    %c0_i32_1 = arith.constant 0 : i32
    return %arg1, %c0_i32, %c0_i32_0 : i32, i32, i32
  }
  func.func @transform_11(%arg0: i32, %arg1: i32) -> (i32, i32, i32) {
    %c0_i32 = arith.constant 0 : i32
    %c0_i32_0 = arith.constant 0 : i32
    %c0_i32_1 = arith.constant 0 : i32
    return %arg1, %c0_i32, %c0_i32_0 : i32, i32, i32
  }
  func.func @transform_12(%arg0: i32, %arg1: i32) -> (i32, i32, i32) {
    %c0_i32 = arith.constant 0 : i32
    %c0_i32_0 = arith.constant 0 : i32
    %c0_i32_1 = arith.constant 0 : i32
    return %arg1, %c0_i32, %c0_i32_0 : i32, i32, i32
  }
  func.func @transform_13(%arg0: i32, %arg1: i32) -> (i32, i32, i32) {
    %c0_i32 = arith.constant 0 : i32
    %c0_i32_0 = arith.constant 0 : i32
    %c0_i32_1 = arith.constant 0 : i32
    return %arg1, %c0_i32, %c0_i32_0 : i32, i32, i32
  }
  func.func @transform_14(%arg0: i32, %arg1: i32) -> (i32, i32, i32) {
    %c0_i32 = arith.constant 0 : i32
    %c0_i32_0 = arith.constant 0 : i32
    %c0_i32_1 = arith.constant 0 : i32
    return %arg0, %c0_i32, %c0_i32_0 : i32, i32, i32
  }
}

</mosaic_0001>

<llo_original>
// kernel: tpu_custom_call.1
$region0: #{tpu_custom_call.1}
  #allocation0 [shape = 'u32[]', space=smem, size = 0x4, offset = 0x4, fixed_abs, tag = 'smem constant byte address 0x4 - core index']
  #allocation1 [shape = 'u32[144,128]{1,0:T(1,128)}', space=vmem, size = 0x12000, scoped, tag = 'internal scratch']
  #allocation2 [shape = 'f32[1,8,32]{2,1,0:T(8,128)}', space=vmem, size = 0x1000, scoped, tag = 'scratch operand']
  %s0 = inlined_call_operand.hbm [shape: f32[2,8,32], index: 0, kind: input, shape index: {}]
  %s1 = inlined_call_operand.hbm [shape: bf16[2,8,8], index: 1, kind: input, shape index: {}]
  %s2 = inlined_call_operand.vmem [shape: bf16[2,32,96], index: 2, kind: input, shape index: {}]
  %s3 = inlined_call_operand.vmem [shape: f32[2,1,96], index: 3, kind: input, shape index: {}]
  %s4 = inlined_call_operand.vmem [shape: bf16[2,32,32], index: 4, kind: input, shape index: {}]
  %s5 = inlined_call_operand.vmem [shape: f32[2,1,32], index: 5, kind: input, shape index: {}]
  %s6 = inlined_call_operand.hbm [shape: f32[2,1,32], index: 6, kind: input, shape index: {}]
  %s7 = inlined_call_operand.hbm [shape: f32[2,1,32], index: 7, kind: input, shape index: {}]
  %s8 = inlined_call_operand.vmem [shape: bf16[2,32,64], index: 8, kind: input, shape index: {}]
  %s9 = inlined_call_operand.hbm [shape: f32[2,1,64], index: 9, kind: input, shape index: {}]
  %s10 = inlined_call_operand.vmem [shape: bf16[2,64,32], index: 10, kind: input, shape index: {}]
  %s11 = inlined_call_operand.vmem [shape: f32[2,1,32], index: 11, kind: input, shape index: {}]
  %s12 = inlined_call_operand.vmem [shape: f32[2,1,32], index: 12, kind: input, shape index: {}]
  %s13 = inlined_call_operand.vmem [shape: f32[2,1,32], index: 13, kind: input, shape index: {}]
  %s14 = inlined_call_operand.hbm [shape: f32[2,8,32], index: 14, kind: output, shape index: {}]
  %s15 = sld [smem:[#allocation0]]
  $region113: #{tpu_custom_call.1} parent=0
    _
  %s17 = ssub.s32 1, %s15
  %s18 = scalar_select 0, %s17, %s15
  $region1: #{tpu_custom_call.1} parent=0
    #allocation3 [shape = 'u8[8192]{0}', space=vmem, size = 0x2000, scoped, tag = 'input window, operand 0']
    #allocation4 [shape = 's32[2]{0}', space=sflag, size = 0x8, scoped, tag = 'scoped memory for tpu_custom_call.1']
    #allocation5 [shape = 's32[2]{0}', space=sflag, size = 0x8, scoped, tag = 'scoped memory for tpu_custom_call.1']
    #allocation6 [shape = 'u8[4096]{0}', space=vmem, size = 0x1000, scoped, tag = 'input window, operand 1']
    #allocation7 [shape = 's32[2]{0}', space=sflag, size = 0x8, scoped, tag = 'scoped memory for tpu_custom_call.1']
    #allocation8 [shape = 'u8[1024]{0}', space=vmem, size = 0x400, scoped, tag = 'input window, operand 6']
    #allocation9 [shape = 'u8[1024]{0}', space=vmem, size = 0x400, scoped, tag = 'input window, operand 7']
    #allocation10 [shape = 's32[2]{0}', space=sflag, size = 0x8, scoped, tag = 'scoped memory for tpu_custom_call.1']
    #allocation11 [shape = 'u8[1024]{0}', space=vmem, size = 0x400, scoped, tag = 'input window, operand 9']
    #allocation12 [shape = 'u8[8192]{0}', space=vmem, size = 0x2000, scoped, tag = 'output window, operand 0']
    %19 = vsyncpa [#allocation4], 0
    %s20 = scalar_lea.sflag [#allocation4], 1
    %21 = vsyncpa %s20, 0
    %22 = vsyncpa [#allocation7], 0
    %s23 = scalar_lea.sflag [#allocation7], 1
    %24 = vsyncpa %s23, 0
    %25 = vsyncpa [#allocation10], 0
    %s26 = scalar_lea.sflag [#allocation10], 1
    %27 = vsyncpa %s26, 0
    %28 = vsyncpa [#allocation5], 0
    %s29 = scalar_lea.sflag [#allocation5], 1
    %30 = vsyncpa %s29, 0
    loop: start=0, step=1, limit=6
    $region2: #{tpu_custom_call.1} parent=1 // loop_pre_header
      _
    $region3: #{tpu_custom_call.1} parent=1 // loop_header
      %s32 = sphi 0, %s36
      %p33 = scmp.ge.s32.totalorder %s32, 6
      %s39 = sphi 0, %s51
      %s40 = sphi 0, %s47
      %s41 = sphi 0, %s39
      %s42 = sphi 0, %s40
      %s43 = sphi 0, %s41
      %s44 = sphi 0, %s42
      %s54 = sphi 0, %s56
      %s57 = sphi 0, %s54
      %s58 = sphi 0, %s57
      %s74 = sphi 0, %s58
      %s80 = sphi 0, %s82
      %s83 = sphi 0, %s80
      %s84 = sphi 0, %s83
      %s100 = sphi 0, %s84
      %s106 = sphi 0, %s108
      %s109 = sphi 0, %s106
      %s110 = sphi 0, %s109
      %s126 = sphi 0, %s110
      %s132 = sphi 0, %s134
      %s135 = sphi 0, %s132
      %s136 = sphi 0, %s135
      %s152 = sphi 0, %s136
      %s158 = sphi 0, %s160
      %s161 = sphi 0, %s158
      %s162 = sphi 0, %s161
      %s178 = sphi 0, %s162
      %s184 = sphi 0, %s186
      %s187 = sphi 0, %s184
      %s188 = sphi 0, %s187
      %s204 = sphi 0, %s188
      %s210 = sphi 0, %s212
      %s213 = sphi 0, %s210
      %s214 = sphi 0, %s213
      %s230 = sphi 0, %s214
      %s236 = sphi 0, %s238
      %s239 = sphi 0, %s236
      %s240 = sphi 0, %s239
      %s256 = sphi 0, %s240
      %s262 = sphi 0, %s264
      %s265 = sphi 0, %s262
      %s266 = sphi 0, %s265
      %s282 = sphi 0, %s266
      %s288 = sphi 0, %s290
      %s291 = sphi 0, %s288
      %s292 = sphi 0, %s291
      %s308 = sphi 0, %s292
      %s314 = sphi 0, %s316
      %s317 = sphi 0, %s314
      %s318 = sphi 0, %s317
      %s334 = sphi 0, %s318
      %s340 = sphi 0, %s342
      %s343 = sphi 0, %s340
      %s344 = sphi 0, %s343
      %s360 = sphi 0, %s344
      %s366 = sphi 0, %s368
      %s369 = sphi 0, %s366
      %s370 = sphi 0, %s369
      %s386 = sphi 0, %s370
      %s392 = sphi 0, %s394
      %s395 = sphi 0, %s392
      %s396 = sphi 0, %s395
      %s412 = sphi 0, %s396
      %s418 = sphi 0, %s420
      %s421 = sphi 0, %s418
      %s422 = sphi 0, %s421
      %s438 = sphi 0, %s422
    $region4: #{tpu_custom_call.1} parent=1 // loop_header_branch
      %35 = sbr.rel (%p33) target = $region8
    $region5: #{tpu_custom_call.1} parent=1 // loop_body
      %s37 = ssub.s32 %s32, 1
      %s38 = ssub.s32 %s32, 2
      %s45 = sadd.s32 1, %s40
      %p46 = scmp.ge.s32.totalorder %s45, 2
      %s47 = scalar_select %p46, 0, %s45
      %s48 = sadd.s32 1, %s39
      %s49 = scalar_select %p46, %s48, %s39
      %p50 = scmp.ge.s32.totalorder %s49, 2
      %s51 = scalar_select %p50, 0, %s49
      %s52 = ssub.s32 %s39, %s51
      %p53 = scmp.eq.s32.totalorder %s52, 0
      %s55 = sadd.s32 %s54, 1
      %s56 = scalar_select %p53, %s54, %s55
      %p59 = pneg %p53
      %p60 = scmp.eq.s32.totalorder %s32, 3
      %p61 = por %p59, %p60
      %p62 = scmp.ne.s32.totalorder %s54, %s57
      %p63 = scmp.eq.s32.totalorder %s32, 0
      %p64 = por %p62, %p63
      %p65 = scmp.ne.s32.totalorder %s54, %s57
      %p66 = scmp.eq.s32.totalorder %s37, 3
      %p67 = por %p65, %p66
      %p68 = scmp.ne.s32.totalorder %s57, %s58
      %p69 = scmp.eq.s32.totalorder %s37, 0
      %p70 = por %p68, %p69
      %p71 = scmp.ne.s32.totalorder %s57, %s58
      %p72 = scmp.eq.s32.totalorder %s38, 3
      %p73 = por %p71, %p72
      %p75 = scmp.ne.s32.totalorder %s58, %s74
      %p76 = scmp.eq.s32.totalorder %s38, 0
      %p77 = por %p75, %p76
      %s78 = ssub.s32 %s39, %s51
      %p79 = scmp.eq.s32.totalorder %s78, 0
      %s81 = sadd.s32 %s80, 1
      %s82 = scalar_select %p79, %s80, %s81
      %p85 = pneg %p79
      %p86 = scmp.eq.s32.totalorder %s32, 3
      %p87 = por %p85, %p86
      %p88 = scmp.ne.s32.totalorder %s80, %s83
      %p89 = scmp.eq.s32.totalorder %s32, 0
      %p90 = por %p88, %p89
      %p91 = scmp.ne.s32.totalorder %s80, %s83
      %p92 = scmp.eq.s32.totalorder %s37, 3
      %p93 = por %p91, %p92
      %p94 = scmp.ne.s32.totalorder %s83, %s84
      %p95 = scmp.eq.s32.totalorder %s37, 0
      %p96 = por %p94, %p95
      %p97 = scmp.ne.s32.totalorder %s83, %s84
      %p98 = scmp.eq.s32.totalorder %s38, 3
      %p99 = por %p97, %p98
      %p101 = scmp.ne.s32.totalorder %s84, %s100
      %p102 = scmp.eq.s32.totalorder %s38, 0
      %p103 = por %p101, %p102
      %s104 = ssub.s32 %s40, %s47
      %p105 = scmp.eq.s32.totalorder %s104, 0
      %s107 = sadd.s32 %s106, 1
      %s108 = scalar_select %p105, %s106, %s107
      %p111 = pneg %p105
      %p112 = scmp.eq.s32.totalorder %s32, 3
      %p113 = por %p111, %p112
      %p114 = scmp.ne.s32.totalorder %s106, %s109
      %p115 = scmp.eq.s32.totalorder %s32, 0
      %p116 = por %p114, %p115
      %p117 = scmp.ne.s32.totalorder %s106, %s109
      %p118 = scmp.eq.s32.totalorder %s37, 3
      %p119 = por %p117, %p118
      %p120 = scmp.ne.s32.totalorder %s109, %s110
      %p121 = scmp.eq.s32.totalorder %s37, 0
      %p122 = por %p120, %p121
      %p123 = scmp.ne.s32.totalorder %s109, %s110
      %p124 = scmp.eq.s32.totalorder %s38, 3
      %p125 = por %p123, %p124
      %p127 = scmp.ne.s32.totalorder %s110, %s126
      %p128 = scmp.eq.s32.totalorder %s38, 0
      %p129 = por %p127, %p128
      %s130 = ssub.s32 %s40, %s47
      %p131 = scmp.eq.s32.totalorder %s130, 0
      %s133 = sadd.s32 %s132, 1
      %s134 = scalar_select %p131, %s132, %s133
      %p137 = pneg %p131
      %p138 = scmp.eq.s32.totalorder %s32, 3
      %p139 = por %p137, %p138
      %p140 = scmp.ne.s32.totalorder %s132, %s135
      %p141 = scmp.eq.s32.totalorder %s32, 0
      %p142 = por %p140, %p141
      %p143 = scmp.ne.s32.totalorder %s132, %s135
      %p144 = scmp.eq.s32.totalorder %s37, 3
      %p145 = por %p143, %p144
      %p146 = scmp.ne.s32.totalorder %s135, %s136
      %p147 = scmp.eq.s32.totalorder %s37, 0
      %p148 = por %p146, %p147
      %p149 = scmp.ne.s32.totalorder %s135, %s136
      %p150 = scmp.eq.s32.totalorder %s38, 3
      %p151 = por %p149, %p150
      %p153 = scmp.ne.s32.totalorder %s136, %s152
      %p154 = scmp.eq.s32.totalorder %s38, 0
      %p155 = por %p153, %p154
      %s156 = ssub.s32 %s40, %s47
      %p157 = scmp.eq.s32.totalorder %s156, 0
      %s159 = sadd.s32 %s158, 1
      %s160 = scalar_select %p157, %s158, %s159
      %p163 = pneg %p157
      %p164 = scmp.eq.s32.totalorder %s32, 3
      %p165 = por %p163, %p164
      %p166 = scmp.ne.s32.totalorder %s158, %s161
      %p167 = scmp.eq.s32.totalorder %s32, 0
      %p168 = por %p166, %p167
      %p169 = scmp.ne.s32.totalorder %s158, %s161
      %p170 = scmp.eq.s32.totalorder %s37, 3
      %p171 = por %p169, %p170
      %p172 = scmp.ne.s32.totalorder %s161, %s162
      %p173 = scmp.eq.s32.totalorder %s37, 0
      %p174 = por %p172, %p173
      %p175 = scmp.ne.s32.totalorder %s161, %s162
      %p176 = scmp.eq.s32.totalorder %s38, 3
      %p177 = por %p175, %p176
      %p179 = scmp.ne.s32.totalorder %s162, %s178
      %p180 = scmp.eq.s32.totalorder %s38, 0
      %p181 = por %p179, %p180
      %s182 = ssub.s32 %s40, %s47
      %p183 = scmp.eq.s32.totalorder %s182, 0
      %s185 = sadd.s32 %s184, 1
      %s186 = scalar_select %p183, %s184, %s185
      %p189 = pneg %p183
      %p190 = scmp.eq.s32.totalorder %s32, 3
      %p191 = por %p189, %p190
      %p192 = scmp.ne.s32.totalorder %s184, %s187
      %p193 = scmp.eq.s32.totalorder %s32, 0
      %p194 = por %p192, %p193
      %p195 = scmp.ne.s32.totalorder %s184, %s187
      %p196 = scmp.eq.s32.totalorder %s37, 3
      %p197 = por %p195, %p196
      %p198 = scmp.ne.s32.totalorder %s187, %s188
      %p199 = scmp.eq.s32.totalorder %s37, 0
      %p200 = por %p198, %p199
      %p201 = scmp.ne.s32.totalorder %s187, %s188
      %p202 = scmp.eq.s32.totalorder %s38, 3
      %p203 = por %p201, %p202
      %p205 = scmp.ne.s32.totalorder %s188, %s204
      %p206 = scmp.eq.s32.totalorder %s38, 0
      %p207 = por %p205, %p206
      %s208 = ssub.s32 %s40, %s47
      %p209 = scmp.eq.s32.totalorder %s208, 0
      %s211 = sadd.s32 %s210, 1
      %s212 = scalar_select %p209, %s210, %s211
      %p215 = pneg %p209
      %p216 = scmp.eq.s32.totalorder %s32, 3
      %p217 = por %p215, %p216
      %p218 = scmp.ne.s32.totalorder %s210, %s213
      %p219 = scmp.eq.s32.totalorder %s32, 0
      %p220 = por %p218, %p219
      %p221 = scmp.ne.s32.totalorder %s210, %s213
      %p222 = scmp.eq.s32.totalorder %s37, 3
      %p223 = por %p221, %p222
      %p224 = scmp.ne.s32.totalorder %s213, %s214
      %p225 = scmp.eq.s32.totalorder %s37, 0
      %p226 = por %p224, %p225
      %p227 = scmp.ne.s32.totalorder %s213, %s214
      %p228 = scmp.eq.s32.totalorder %s38, 3
      %p229 = por %p227, %p228
      %p231 = scmp.ne.s32.totalorder %s214, %s230
      %p232 = scmp.eq.s32.totalorder %s38, 0
      %p233 = por %p231, %p232
      %s234 = ssub.s32 %s40, %s47
      %p235 = scmp.eq.s32.totalorder %s234, 0
      %s237 = sadd.s32 %s236, 1
      %s238 = scalar_select %p235, %s236, %s237
      %p241 = pneg %p235
      %p242 = scmp.eq.s32.totalorder %s32, 3
      %p243 = por %p241, %p242
      %p244 = scmp.ne.s32.totalorder %s236, %s239
      %p245 = scmp.eq.s32.totalorder %s32, 0
      %p246 = por %p244, %p245
      %p247 = scmp.ne.s32.totalorder %s236, %s239
      %p248 = scmp.eq.s32.totalorder %s37, 3
      %p249 = por %p247, %p248
      %p250 = scmp.ne.s32.totalorder %s239, %s240
      %p251 = scmp.eq.s32.totalorder %s37, 0
      %p252 = por %p250, %p251
      %p253 = scmp.ne.s32.totalorder %s239, %s240
      %p254 = scmp.eq.s32.totalorder %s38, 3
      %p255 = por %p253, %p254
      %p257 = scmp.ne.s32.totalorder %s240, %s256
      %p258 = scmp.eq.s32.totalorder %s38, 0
      %p259 = por %p257, %p258
      %s260 = ssub.s32 %s40, %s47
      %p261 = scmp.eq.s32.totalorder %s260, 0
      %s263 = sadd.s32 %s262, 1
      %s264 = scalar_select %p261, %s262, %s263
      %p267 = pneg %p261
      %p268 = scmp.eq.s32.totalorder %s32, 3
      %p269 = por %p267, %p268
      %p270 = scmp.ne.s32.totalorder %s262, %s265
      %p271 = scmp.eq.s32.totalorder %s32, 0
      %p272 = por %p270, %p271
      %p273 = scmp.ne.s32.totalorder %s262, %s265
      %p274 = scmp.eq.s32.totalorder %s37, 3
      %p275 = por %p273, %p274
      %p276 = scmp.ne.s32.totalorder %s265, %s266
      %p277 = scmp.eq.s32.totalorder %s37, 0
      %p278 = por %p276, %p277
      %p279 = scmp.ne.s32.totalorder %s265, %s266
      %p280 = scmp.eq.s32.totalorder %s38, 3
      %p281 = por %p279, %p280
      %p283 = scmp.ne.s32.totalorder %s266, %s282
      %p284 = scmp.eq.s32.totalorder %s38, 0
      %p285 = por %p283, %p284
      %s286 = ssub.s32 %s40, %s47
      %p287 = scmp.eq.s32.totalorder %s286, 0
      %s289 = sadd.s32 %s288, 1
      %s290 = scalar_select %p287, %s288, %s289
      %p293 = pneg %p287
      %p294 = scmp.eq.s32.totalorder %s32, 3
      %p295 = por %p293, %p294
      %p296 = scmp.ne.s32.totalorder %s288, %s291
      %p297 = scmp.eq.s32.totalorder %s32, 0
      %p298 = por %p296, %p297
      %p299 = scmp.ne.s32.totalorder %s288, %s291
      %p300 = scmp.eq.s32.totalorder %s37, 3
      %p301 = por %p299, %p300
      %p302 = scmp.ne.s32.totalorder %s291, %s292
      %p303 = scmp.eq.s32.totalorder %s37, 0
      %p304 = por %p302, %p303
      %p305 = scmp.ne.s32.totalorder %s291, %s292
      %p306 = scmp.eq.s32.totalorder %s38, 3
      %p307 = por %p305, %p306
      %p309 = scmp.ne.s32.totalorder %s292, %s308
      %p310 = scmp.eq.s32.totalorder %s38, 0
      %p311 = por %p309, %p310
      %s312 = ssub.s32 %s40, %s47
      %p313 = scmp.eq.s32.totalorder %s312, 0
      %s315 = sadd.s32 %s314, 1
      %s316 = scalar_select %p313, %s314, %s315
      %p319 = pneg %p313
      %p320 = scmp.eq.s32.totalorder %s32, 3
      %p321 = por %p319, %p320
      %p322 = scmp.ne.s32.totalorder %s314, %s317
      %p323 = scmp.eq.s32.totalorder %s32, 0
      %p324 = por %p322, %p323
      %p325 = scmp.ne.s32.totalorder %s314, %s317
      %p326 = scmp.eq.s32.totalorder %s37, 3
      %p327 = por %p325, %p326
      %p328 = scmp.ne.s32.totalorder %s317, %s318
      %p329 = scmp.eq.s32.totalorder %s37, 0
      %p330 = por %p328, %p329
      %p331 = scmp.ne.s32.totalorder %s317, %s318
      %p332 = scmp.eq.s32.totalorder %s38, 3
      %p333 = por %p331, %p332
      %p335 = scmp.ne.s32.totalorder %s318, %s334
      %p336 = scmp.eq.s32.totalorder %s38, 0
      %p337 = por %p335, %p336
      %s338 = ssub.s32 %s40, %s47
      %p339 = scmp.eq.s32.totalorder %s338, 0
      %s341 = sadd.s32 %s340, 1
      %s342 = scalar_select %p339, %s340, %s341
      %p345 = pneg %p339
      %p346 = scmp.eq.s32.totalorder %s32, 3
      %p347 = por %p345, %p346
      %p348 = scmp.ne.s32.totalorder %s340, %s343
      %p349 = scmp.eq.s32.totalorder %s32, 0
      %p350 = por %p348, %p349
      %p351 = scmp.ne.s32.totalorder %s340, %s343
      %p352 = scmp.eq.s32.totalorder %s37, 3
      %p353 = por %p351, %p352
      %p354 = scmp.ne.s32.totalorder %s343, %s344
      %p355 = scmp.eq.s32.totalorder %s37, 0
      %p356 = por %p354, %p355
      %p357 = scmp.ne.s32.totalorder %s343, %s344
      %p358 = scmp.eq.s32.totalorder %s38, 3
      %p359 = por %p357, %p358
      %p361 = scmp.ne.s32.totalorder %s344, %s360
      %p362 = scmp.eq.s32.totalorder %s38, 0
      %p363 = por %p361, %p362
      %s364 = ssub.s32 %s40, %s47
      %p365 = scmp.eq.s32.totalorder %s364, 0
      %s367 = sadd.s32 %s366, 1
      %s368 = scalar_select %p365, %s366, %s367
      %p371 = pneg %p365
      %p372 = scmp.eq.s32.totalorder %s32, 3
      %p373 = por %p371, %p372
      %p374 = scmp.ne.s32.totalorder %s366, %s369
      %p375 = scmp.eq.s32.totalorder %s32, 0
      %p376 = por %p374, %p375
      %p377 = scmp.ne.s32.totalorder %s366, %s369
      %p378 = scmp.eq.s32.totalorder %s37, 3
      %p379 = por %p377, %p378
      %p380 = scmp.ne.s32.totalorder %s369, %s370
      %p381 = scmp.eq.s32.totalorder %s37, 0
      %p382 = por %p380, %p381
      %p383 = scmp.ne.s32.totalorder %s369, %s370
      %p384 = scmp.eq.s32.totalorder %s38, 3
      %p385 = por %p383, %p384
      %p387 = scmp.ne.s32.totalorder %s370, %s386
      %p388 = scmp.eq.s32.totalorder %s38, 0
      %p389 = por %p387, %p388
      %s390 = ssub.s32 %s40, %s47
      %p391 = scmp.eq.s32.totalorder %s390, 0
      %s393 = sadd.s32 %s392, 1
      %s394 = scalar_select %p391, %s392, %s393
      %p397 = pneg %p391
      %p398 = scmp.eq.s32.totalorder %s32, 3
      %p399 = por %p397, %p398
      %p400 = scmp.ne.s32.totalorder %s392, %s395
      %p401 = scmp.eq.s32.totalorder %s32, 0
      %p402 = por %p400, %p401
      %p403 = scmp.ne.s32.totalorder %s392, %s395
      %p404 = scmp.eq.s32.totalorder %s37, 3
      %p405 = por %p403, %p404
      %p406 = scmp.ne.s32.totalorder %s395, %s396
      %p407 = scmp.eq.s32.totalorder %s37, 0
      %p408 = por %p406, %p407
      %p409 = scmp.ne.s32.totalorder %s395, %s396
      %p410 = scmp.eq.s32.totalorder %s38, 3
      %p411 = por %p409, %p410
      %p413 = scmp.ne.s32.totalorder %s396, %s412
      %p414 = scmp.eq.s32.totalorder %s38, 0
      %p415 = por %p413, %p414
      %s416 = ssub.s32 %s39, %s51
      %p417 = scmp.eq.s32.totalorder %s416, 0
      %s419 = sadd.s32 %s418, 1
      %s420 = scalar_select %p417, %s418, %s419
      %p423 = pneg %p417
      %p424 = scmp.eq.s32.totalorder %s32, 3
      %p425 = por %p423, %p424
      %p426 = scmp.ne.s32.totalorder %s418, %s421
      %p427 = scmp.eq.s32.totalorder %s32, 0
      %p428 = por %p426, %p427
      %p429 = scmp.ne.s32.totalorder %s418, %s421
      %p430 = scmp.eq.s32.totalorder %s37, 3
      %p431 = por %p429, %p430
      %p432 = scmp.ne.s32.totalorder %s421, %s422
      %p433 = scmp.eq.s32.totalorder %s37, 0
      %p434 = por %p432, %p433
      %p435 = scmp.ne.s32.totalorder %s421, %s422
      %p436 = scmp.eq.s32.totalorder %s38, 3
      %p437 = por %p435, %p436
      %p439 = scmp.ne.s32.totalorder %s422, %s438
      %p440 = scmp.eq.s32.totalorder %s38, 0
      %p441 = por %p439, %p440
      %p442 = scmp.le.s32.totalorder 1, %s32
      %p443 = scmp.lt.s32.totalorder %s32, 5
      %p444 = pnand %p442, %p443
      %p445 = pneg %p444
      // Predicated region
      $region9: #{tpu_custom_call.1} parent=5 // pred_check
        _
      $region10: #{tpu_custom_call.1} parent=5 // pred_check_branch
        %447 = sbr.rel (%p444) target = $region12
      $region11: #{tpu_custom_call.1} parent=5 // pred_region
        %s448 = ssub.s32 %s32, 1
      $region12: #{tpu_custom_call.1} parent=5 // pred_fallthru
        _
      %p449 = scmp.lt.s32.totalorder %s32, 4
      // Predicated region
      $region13: #{tpu_custom_call.1} parent=5 // pred_check
        %p450 = pneg %p449
      $region14: #{tpu_custom_call.1} parent=5 // pred_check_branch
        %452 = sbr.rel (%p450) target = $region16
      $region15: #{tpu_custom_call.1} parent=5 // pred_region
        // Predicated region
        $region17: #{tpu_custom_call.1} parent=15 // pred_check
          %p453 = pneg %p64
        $region18: #{tpu_custom_call.1} parent=15 // pred_check_branch
          %455 = sbr.rel (%p453) target = $region20
        $region19: #{tpu_custom_call.1} parent=15 // pred_region
          %s456 = sand.u32 %s54, 1
          %s457 = scalar_lea.sflag [#allocation4], %s456
          %s458 = sand.u32 %s54, 1
          %s459 = smul.addr %s458, 8
          %s460 = scalar_lea.vmem [#allocation3], %s459
          %s462 = ssub.s32 128, 128
          %463 = vsyncadd %s457, %s462
          %s464 = smul.addr %s39, 128
          %s465 = scalar_lea.hbm %s0, %s464
          %s467 = sshll.u32 %s460, 4
          %s468 = int_to_ptr.vmem [resolvable:$true] %s467
          %470 = dma.hbm_to_vmem [thread:$0]  %s465, 128, %s468, %s457
        $region20: #{tpu_custom_call.1} parent=15 // pred_fallthru
          _
        // Predicated region
        $region21: #{tpu_custom_call.1} parent=15 // pred_check
          %p471 = pneg %p90
        $region22: #{tpu_custom_call.1} parent=15 // pred_check_branch
          %473 = sbr.rel (%p471) target = $region24
        $region23: #{tpu_custom_call.1} parent=15 // pred_region
          %s474 = sand.u32 %s32, 1
          %s475 = scalar_lea.sflag [#allocation7], %s474
          %s476 = sand.u32 %s80, 1
          %s477 = smul.addr %s476, 4
          %s478 = scalar_lea.vmem [#allocation6], %s477
          %s480 = ssub.s32 64, 64
          %481 = vsyncadd %s475, %s480
          %s482 = smul.addr %s39, 64
          %s483 = scalar_lea.hbm %s1, %s482
          %s485 = sshll.u32 %s478, 4
          %s486 = int_to_ptr.vmem [resolvable:$true] %s485
          %488 = dma.hbm_to_vmem [thread:$0]  %s483, 64, %s486, %s475
        $region24: #{tpu_custom_call.1} parent=15 // pred_fallthru
          _
        // Predicated region
        $region25: #{tpu_custom_call.1} parent=15 // pred_check
          %p489 = pneg %p116
        $region26: #{tpu_custom_call.1} parent=15 // pred_check_branch
          %491 = sbr.rel (%p489) target = $region28
        $region27: #{tpu_custom_call.1} parent=15 // pred_region
          %p492 = scmp.lt.s32.totalorder %s40, 1
          %s493 = scalar_select %p492, %s40, 1
          %s494 = smul.addr %s493, 4
          %s495 = smul.addr %s494, 4
          %s496 = scalar_lea.vmem %s2, %s495
        $region28: #{tpu_custom_call.1} parent=15 // pred_fallthru
          _
        // Predicated region
        $region29: #{tpu_custom_call.1} parent=15 // pred_check
          %p497 = pneg %p142
        $region30: #{tpu_custom_call.1} parent=15 // pred_check_branch
          %499 = sbr.rel (%p497) target = $region32
        $region31: #{tpu_custom_call.1} parent=15 // pred_region
          %p500 = scmp.lt.s32.totalorder %s40, 1
          %s501 = scalar_select %p500, %s40, 1
          %s502 = scalar_lea.vmem %s3, %s501
        $region32: #{tpu_custom_call.1} parent=15 // pred_fallthru
          _
        // Predicated region
        $region33: #{tpu_custom_call.1} parent=15 // pred_check
          %p503 = pneg %p168
        $region34: #{tpu_custom_call.1} parent=15 // pred_check_branch
          %505 = sbr.rel (%p503) target = $region36
        $region35: #{tpu_custom_call.1} parent=15 // pred_region
          %p506 = scmp.lt.s32.totalorder %s40, 1
          %s507 = scalar_select %p506, %s40, 1
          %s508 = smul.addr %s507, 4
          %s509 = smul.addr %s508, 4
          %s510 = scalar_lea.vmem %s4, %s509
        $region36: #{tpu_custom_call.1} parent=15 // pred_fallthru
          _
        // Predicated region
        $region37: #{tpu_custom_call.1} parent=15 // pred_check
          %p511 = pneg %p194
        $region38: #{tpu_custom_call.1} parent=15 // pred_check_branch
          %513 = sbr.rel (%p511) target = $region40
        $region39: #{tpu_custom_call.1} parent=15 // pred_region
          %p514 = scmp.lt.s32.totalorder %s40, 1
          %s515 = scalar_select %p514, %s40, 1
          %s516 = scalar_lea.vmem %s5, %s515
        $region40: #{tpu_custom_call.1} parent=15 // pred_fallthru
          _
        // Predicated region
        $region41: #{tpu_custom_call.1} parent=15 // pred_check
          %p517 = pneg %p220
        $region42: #{tpu_custom_call.1} parent=15 // pred_check_branch
          %519 = sbr.rel (%p517) target = $region44
        $region43: #{tpu_custom_call.1} parent=15 // pred_region
          %s520 = sand.u32 %s32, 1
          %s521 = scalar_lea.sflag [#allocation7], %s520
          %s522 = sand.u32 %s210, 1
          %s523 = scalar_lea.vmem [#allocation8], %s522
          %s525 = ssub.s32 16, 16
          %526 = vsyncadd %s521, %s525
          %s527 = smul.addr %s40, 16
          %s528 = scalar_lea.hbm %s6, %s527
          %s530 = sshll.u32 %s523, 4
          %s531 = int_to_ptr.vmem [resolvable:$true] %s530
          %533 = dma.hbm_to_vmem [thread:$0]  %s528, 16, %s531, %s521
        $region44: #{tpu_custom_call.1} parent=15 // pred_fallthru
          _
        // Predicated region
        $region45: #{tpu_custom_call.1} parent=15 // pred_check
          %p534 = pneg %p246
        $region46: #{tpu_custom_call.1} parent=15 // pred_check_branch
          %536 = sbr.rel (%p534) target = $region48
        $region47: #{tpu_custom_call.1} parent=15 // pred_region
          %s537 = sand.u32 %s32, 1
          %s538 = scalar_lea.sflag [#allocation10], %s537
          %s539 = sand.u32 %s236, 1
          %s540 = scalar_lea.vmem [#allocation9], %s539
          %s542 = ssub.s32 16, 16
          %543 = vsyncadd %s538, %s542
          %s544 = smul.addr %s40, 16
          %s545 = scalar_lea.hbm %s7, %s544
          %s547 = sshll.u32 %s540, 4
          %s548 = int_to_ptr.vmem [resolvable:$true] %s547
          %550 = dma.hbm_to_vmem [thread:$0]  %s545, 16, %s548, %s538
        $region48: #{tpu_custom_call.1} parent=15 // pred_fallthru
          _
        // Predicated region
        $region49: #{tpu_custom_call.1} parent=15 // pred_check
          %p551 = pneg %p272
        $region50: #{tpu_custom_call.1} parent=15 // pred_check_branch
          %553 = sbr.rel (%p551) target = $region52
        $region51: #{tpu_custom_call.1} parent=15 // pred_region
          %p554 = scmp.lt.s32.totalorder %s40, 1
          %s555 = scalar_select %p554, %s40, 1
          %s556 = smul.addr %s555, 4
          %s557 = smul.addr %s556, 4
          %s558 = scalar_lea.vmem %s8, %s557
        $region52: #{tpu_custom_call.1} parent=15 // pred_fallthru
          _
        // Predicated region
        $region53: #{tpu_custom_call.1} parent=15 // pred_check
          %p559 = pneg %p298
        $region54: #{tpu_custom_call.1} parent=15 // pred_check_branch
          %561 = sbr.rel (%p559) target = $region56
        $region55: #{tpu_custom_call.1} parent=15 // pred_region
          %s562 = sand.u32 %s32, 1
          %s563 = scalar_lea.sflag [#allocation10], %s562
          %s564 = sand.u32 %s288, 1
          %s565 = scalar_lea.vmem [#allocation11], %s564
          %s567 = ssub.s32 16, 16
          %568 = vsyncadd %s563, %s567
          %s569 = smul.addr %s40, 16
          %s570 = scalar_lea.hbm %s9, %s569
          %s572 = sshll.u32 %s565, 4
          %s573 = int_to_ptr.vmem [resolvable:$true] %s572
          %575 = dma.hbm_to_vmem [thread:$0]  %s570, 16, %s573, %s563
        $region56: #{tpu_custom_call.1} parent=15 // pred_fallthru
          _
        // Predicated region
        $region57: #{tpu_custom_call.1} parent=15 // pred_check
          %p576 = pneg %p324
        $region58: #{tpu_custom_call.1} parent=15 // pred_check_branch
          %578 = sbr.rel (%p576) target = $region60
        $region59: #{tpu_custom_call.1} parent=15 // pred_region
          %p579 = scmp.lt.s32.totalorder %s40, 1
          %s580 = scalar_select %p579, %s40, 1
          %s581 = smul.addr %s580, 8
          %s582 = smul.addr %s581, 4
          %s583 = scalar_lea.vmem %s10, %s582
        $region60: #{tpu_custom_call.1} parent=15 // pred_fallthru
          _
        // Predicated region
        $region61: #{tpu_custom_call.1} parent=15 // pred_check
          %p584 = pneg %p350
        $region62: #{tpu_custom_call.1} parent=15 // pred_check_branch
          %586 = sbr.rel (%p584) target = $region64
        $region63: #{tpu_custom_call.1} parent=15 // pred_region
          %p587 = scmp.lt.s32.totalorder %s40, 1
          %s588 = scalar_select %p587, %s40, 1
          %s589 = scalar_lea.vmem %s11, %s588
        $region64: #{tpu_custom_call.1} parent=15 // pred_fallthru
          _
        // Predicated region
        $region65: #{tpu_custom_call.1} parent=15 // pred_check
          %p590 = pneg %p376
        $region66: #{tpu_custom_call.1} parent=15 // pred_check_branch
          %592 = sbr.rel (%p590) target = $region68
        $region67: #{tpu_custom_call.1} parent=15 // pred_region
          %p593 = scmp.lt.s32.totalorder %s40, 1
          %s594 = scalar_select %p593, %s40, 1
          %s595 = scalar_lea.vmem %s12, %s594
        $region68: #{tpu_custom_call.1} parent=15 // pred_fallthru
          _
        // Predicated region
        $region69: #{tpu_custom_call.1} parent=15 // pred_check
          %p596 = pneg %p402
        $region70: #{tpu_custom_call.1} parent=15 // pred_check_branch
          %598 = sbr.rel (%p596) target = $region72
        $region71: #{tpu_custom_call.1} parent=15 // pred_region
          %p599 = scmp.lt.s32.totalorder %s40, 1
          %s600 = scalar_select %p599, %s40, 1
          %s601 = scalar_lea.vmem %s13, %s600
        $region72: #{tpu_custom_call.1} parent=15 // pred_fallthru
          _
      $region16: #{tpu_custom_call.1} parent=5 // pred_fallthru
        _
      %p602 = scmp.le.s32.totalorder 1, %s32
      %p603 = scmp.lt.s32.totalorder %s32, 5
      %p604 = pnand %p602, %p603
      %p605 = pneg %p604
      // Predicated region
      $region73: #{tpu_custom_call.1} parent=5 // pred_check
        _
      $region74: #{tpu_custom_call.1} parent=5 // pred_check_branch
        %607 = sbr.rel (%p604) target = $region76
      $region75: #{tpu_custom_call.1} parent=5 // pred_region
        %s608 = ssub.s32 %s32, 1
        %s609 = sand.u32 %s57, 1
        %s610 = scalar_lea.sflag [#allocation4], %s609
        %s611 = sand.u32 %s57, 1
        %s612 = smul.addr %s611, 8
        %s613 = scalar_lea.vmem [#allocation3], %s612
        // Predicated region
        $region77: #{tpu_custom_call.1} parent=75 // pred_check
          %p614 = pneg %p70
        $region78: #{tpu_custom_call.1} parent=75 // pred_check_branch
          %616 = sbr.rel (%p614) target = $region80
        $region79: #{tpu_custom_call.1} parent=75 // pred_region
          %617 = dma.done %s610, 128
        $region80: #{tpu_custom_call.1} parent=75 // pred_fallthru
          _
        %s618 = sand.u32 %s37, 1
        %s619 = scalar_lea.sflag [#allocation7], %s618
        %s620 = sand.u32 %s83, 1
        %s621 = smul.addr %s620, 4
        %s622 = scalar_lea.vmem [#allocation6], %s621
        // Predicated region
        $region81: #{tpu_custom_call.1} parent=75 // pred_check
          %p623 = pneg %p96
        $region82: #{tpu_custom_call.1} parent=75 // pred_check_branch
          %625 = sbr.rel (%p623) target = $region84
        $region83: #{tpu_custom_call.1} parent=75 // pred_region
          %626 = dma.done %s619, 64
        $region84: #{tpu_custom_call.1} parent=75 // pred_fallthru
          _
        %s627 = sand.u32 %s37, 1
        %s628 = scalar_lea.sflag [#allocation7], %s627
        %s629 = sand.u32 %s213, 1
        %s630 = scalar_lea.vmem [#allocation8], %s629
        // Predicated region
        $region85: #{tpu_custom_call.1} parent=75 // pred_check
          %p631 = pneg %p226
        $region86: #{tpu_custom_call.1} parent=75 // pred_check_branch
          %633 = sbr.rel (%p631) target = $region88
        $region87: #{tpu_custom_call.1} parent=75 // pred_region
          %634 = dma.done %s628, 16
        $region88: #{tpu_custom_call.1} parent=75 // pred_fallthru
          _
        %s635 = sand.u32 %s37, 1
        %s636 = scalar_lea.sflag [#allocation10], %s635
        %s637 = sand.u32 %s239, 1
        %s638 = scalar_lea.vmem [#allocation9], %s637
        // Predicated region
        $region89: #{tpu_custom_call.1} parent=75 // pred_check
          %p639 = pneg %p252
        $region90: #{tpu_custom_call.1} parent=75 // pred_check_branch
          %641 = sbr.rel (%p639) target = $region92
        $region91: #{tpu_custom_call.1} parent=75 // pred_region
          %642 = dma.done %s636, 16
        $region92: #{tpu_custom_call.1} parent=75 // pred_fallthru
          _
        %s643 = sand.u32 %s37, 1
        %s644 = scalar_lea.sflag [#allocation10], %s643
        %s645 = sand.u32 %s291, 1
        %s646 = scalar_lea.vmem [#allocation11], %s645
        // Predicated region
        $region93: #{tpu_custom_call.1} parent=75 // pred_check
          %p647 = pneg %p304
        $region94: #{tpu_custom_call.1} parent=75 // pred_check_branch
          %649 = sbr.rel (%p647) target = $region96
        $region95: #{tpu_custom_call.1} parent=75 // pred_region
          %650 = dma.done %s644, 16
        $region96: #{tpu_custom_call.1} parent=75 // pred_fallthru
          _
        %s651 = sand.u32 %s57, 1
        %s652 = scalar_lea.sflag [#allocation4], %s651
        %s653 = sand.u32 %s57, 1
        %s654 = smul.addr %s653, 8
        %s655 = scalar_lea.vmem [#allocation3], %s654
        %p656 = pneg %p70
        %p657 = pneg %p67
        %s658 = sand.u32 %s37, 1
        %s659 = scalar_lea.sflag [#allocation7], %s658
        %s660 = sand.u32 %s83, 1
        %s661 = smul.addr %s660, 4
        %s662 = scalar_lea.vmem [#allocation6], %s661
        %p663 = pneg %p96
        %p664 = pneg %p93
        %p665 = scmp.lt.s32.totalorder %s42, 1
        %s666 = scalar_select %p665, %s42, 1
        %s667 = smul.addr %s666, 4
        %s668 = smul.addr %s667, 4
        %s669 = scalar_lea.vmem %s2, %s668
        %p670 = pneg %p122
        %p671 = pneg %p119
        %p672 = scmp.lt.s32.totalorder %s42, 1
        %s673 = scalar_select %p672, %s42, 1
        %s674 = scalar_lea.vmem %s3, %s673
        %p675 = pneg %p148
        %p676 = pneg %p145
        %p677 = scmp.lt.s32.totalorder %s42, 1
        %s678 = scalar_select %p677, %s42, 1
        %s679 = smul.addr %s678, 4
        %s680 = smul.addr %s679, 4
        %s681 = scalar_lea.vmem %s4, %s680
        %p682 = pneg %p174
        %p683 = pneg %p171
        %p684 = scmp.lt.s32.totalorder %s42, 1
        %s685 = scalar_select %p684, %s42, 1
        %s686 = scalar_lea.vmem %s5, %s685
        %p687 = pneg %p200
        %p688 = pneg %p197
        %s689 = sand.u32 %s37, 1
        %s690 = scalar_lea.sflag [#allocation7], %s689
        %s691 = sand.u32 %s213, 1
        %s692 = scalar_lea.vmem [#allocation8], %s691
        %p693 = pneg %p226
        %p694 = pneg %p223
        %s695 = sand.u32 %s37, 1
        %s696 = scalar_lea.sflag [#allocation10], %s695
        %s697 = sand.u32 %s239, 1
        %s698 = scalar_lea.vmem [#allocation9], %s697
        %p699 = pneg %p252
        %p700 = pneg %p249
        %p701 = scmp.lt.s32.totalorder %s42, 1
        %s702 = scalar_select %p701, %s42, 1
        %s703 = smul.addr %s702, 4
        %s704 = smul.addr %s703, 4
        %s705 = scalar_lea.vmem %s8, %s704
        %p706 = pneg %p278
        %p707 = pneg %p275
        %s708 = sand.u32 %s37, 1
        %s709 = scalar_lea.sflag [#allocation10], %s708
        %s710 = sand.u32 %s291, 1
        %s711 = scalar_lea.vmem [#allocation11], %s710
        %p712 = pneg %p304
        %p713 = pneg %p301
        %p714 = scmp.lt.s32.totalorder %s42, 1
        %s715 = scalar_select %p714, %s42, 1
        %s716 = smul.addr %s715, 8
        %s717 = smul.addr %s716, 4
        %s718 = scalar_lea.vmem %s10, %s717
        %p719 = pneg %p330
        %p720 = pneg %p327
        %p721 = scmp.lt.s32.totalorder %s42, 1
        %s722 = scalar_select %p721, %s42, 1
        %s723 = scalar_lea.vmem %s11, %s722
        %p724 = pneg %p356
        %p725 = pneg %p353
        %p726 = scmp.lt.s32.totalorder %s42, 1
        %s727 = scalar_select %p726, %s42, 1
        %s728 = scalar_lea.vmem %s12, %s727
        %p729 = pneg %p382
        %p730 = pneg %p379
        %p731 = scmp.lt.s32.totalorder %s42, 1
        %s732 = scalar_select %p731, %s42, 1
        %s733 = scalar_lea.vmem %s13, %s732
        %p734 = pneg %p408
        %p735 = pneg %p405
        %p736 = pneg %p434
        %p737 = pneg %p431
        %s738 = sand.u32 %s421, 1
        %s739 = scalar_lea.sflag [#allocation5], %s738
        %s740 = sand.u32 %s421, 1
        %s741 = smul.addr %s740, 8
        %s742 = scalar_lea.vmem [#allocation12], %s741
        %p743 = scmp.lt.s32.totalorder %s42, 1
        %s744 = scalar_select %p743, %s42, 1
        %s745 = smul.addr %s744, 4
        %s746 = smul.addr %s745, 4
        %s747 = scalar_lea.vmem %s2, %s746
        %p748 = scmp.lt.s32.totalorder %s42, 1
        %s749 = scalar_select %p748, %s42, 1
        %s750 = scalar_lea.vmem %s3, %s749
        %p751 = scmp.lt.s32.totalorder %s42, 1
        %s752 = scalar_select %p751, %s42, 1
        %s753 = smul.addr %s752, 4
        %s754 = smul.addr %s753, 4
        %s755 = scalar_lea.vmem %s4, %s754
        %p756 = scmp.lt.s32.totalorder %s42, 1
        %s757 = scalar_select %p756, %s42, 1
        %s758 = scalar_lea.vmem %s5, %s757
        %p759 = scmp.lt.s32.totalorder %s42, 1
        %s760 = scalar_select %p759, %s42, 1
        %s761 = smul.addr %s760, 4
        %s762 = smul.addr %s761, 4
        %s763 = scalar_lea.vmem %s8, %s762
        %p764 = scmp.lt.s32.totalorder %s42, 1
        %s765 = scalar_select %p764, %s42, 1
        %s766 = smul.addr %s765, 8
        %s767 = smul.addr %s766, 4
        %s768 = scalar_lea.vmem %s10, %s767
        %p769 = scmp.lt.s32.totalorder %s42, 1
        %s770 = scalar_select %p769, %s42, 1
        %s771 = scalar_lea.vmem %s11, %s770
        %p772 = scmp.lt.s32.totalorder %s42, 1
        %s773 = scalar_select %p772, %s42, 1
        %s774 = scalar_lea.vmem %s12, %s773
        %p775 = scmp.lt.s32.totalorder %s42, 1
        %s776 = scalar_select %p775, %s42, 1
        %s777 = scalar_lea.vmem %s13, %s776
        %p779 = scmp.eq.s32.totalorder %s42, 0
        // Predicated region
        $region97: #{tpu_custom_call.1} parent=75 // pred_check
          %p780 = pneg %p779
        $region98: #{tpu_custom_call.1} parent=75 // pred_check_branch
          %782 = sbr.rel (%p780) target = $region100
        $region99: #{tpu_custom_call.1} parent=75 // pred_region
          %v783 = vld [vmem:[%s613] sm:$0xff]
          %vm784 = vcmask 261120
          %785 = vst.msk [vmem:[%s742] sm:$0xff] %vm784, %v783
        $region100: #{tpu_custom_call.1} parent=75 // pred_fallthru
          _
        %v786 = vld [vmem:[%s742] sm:$0xff]
        %v787 = vpack.c.bf16 %v786, %v786
        %v788 = vld [vmem:[%s747] sm:$0xf]
        %v789 = vld [vmem:[%s747 + $0x4] sm:$0xf]
        %v790 = vld [vmem:[%s747 + $0x8] sm:$0xf]
        %v791 = vld [vmem:[%s747 + $0xc] sm:$0xf]
        %v792 = vld [vmem:[%s750] sm:$0x1]
        %v794 = vlaneseq
        %v795 = vshrl.u32 %v794, 7
        %v796 = vsub.s32 0, %v795
        %v797 = vrot.slane %v792, %v796
        %v803 = vunpack.c.l.b16 %v788
        %v804 = vunpack.c.l.b16 %v789
        %v805 = vunpack.c.l.b16 %v790
        %v806 = vunpack.c.l.b16 %v791
        %v807 = vpack.c.b16 %v804, %v803
        %v808 = vpack.c.b16 %v806, %v805
        %vm811 = vcmask 261120
        %v813 = vsel %vm811, %v787, 0
        %815 = vmatprep.subr.bf16.mxu0 0
        %816 = vmatpush1.bf16.msra.mxu0 %v807
        %817 = vmatprep.subr.bf16.mxu0 0
        %818 = vmatpush1.bf16.msra.mxu0 %v808
        %819 = vmatprep.subr.bf16.mxu0 0
        %820 = vmatpush1.bf16.msra.mxu0 0
        %821 = vmatprep.subr.bf16.mxu0 0
        %822 = vmatpush1.bf16.msra.mxu0 0
        %823 = vmatprep.subr.bf16.mxu0 0
        %824 = vmatpush1.bf16.msra.mxu0 0
        %825 = vmatprep.subr.bf16.mxu0 0
        %826 = vmatpush1.bf16.msra.mxu0 0
        %827 = vmatprep.subr.bf16.mxu0 0
        %828 = vmatpush1.bf16.msra.mxu0 0
        %829 = vmatprep.subr.bf16.mxu0 0
        %830 = vmatpush1.bf16.msra.mxu0 0
        %831 = vmatprep.subr.bf16.mxu0 0
        %832 = vmatpush1.bf16.msra.mxu0 0
        %833 = vmatprep.subr.bf16.mxu0 0
        %834 = vmatpush1.bf16.msra.mxu0 0
        %835 = vmatprep.subr.bf16.mxu0 0
        %836 = vmatpush1.bf16.msra.mxu0 0
        %837 = vmatprep.subr.bf16.mxu0 0
        %838 = vmatpush1.bf16.msra.mxu0 0
        %839 = vmatprep.subr.bf16.mxu0 0
        %840 = vmatpush1.bf16.msra.mxu0 0
        %841 = vmatprep.subr.bf16.mxu0 0
        %842 = vmatpush1.bf16.msra.mxu0 0
        %843 = vmatprep.subr.bf16.mxu0 0
        %844 = vmatpush1.bf16.msra.mxu0 0
        %845 = vmatprep.subr.bf16.mxu0 0
        %846 = vmatpush1.bf16.msra.mxu0 0
        %847 = vmatprep.mubr.bf16.mxu0 0
        %848 = vmatmul.mubr.bf16.gmra.mrb[0].mxu0 %v813
        %v849 = vpop.f32.mrb[0].mxu0
        %v850 = vadd.f32 %v797, %v849
        %v851 = vpop.f32.mrb[0].mxu0
        %v852 = vpop.f32.mrb[0].mxu0
        %v853 = vpop.f32.mrb[0].mxu0
        %854 = vdwg.mxu0
        %v855 = vmul.f32 %v850, 0.35355338
        %857 = vrot.lane.b32.xlu0 %v855, 120
        %v858 = vpop.permute.xlu0 %857
        %860 = vrot.lane.b32.xlu0 %v855, 112
        %v861 = vpop.permute.xlu0 %860
        %863 = vrot.lane.b32.xlu0 %v855, 104
        %v864 = vpop.permute.xlu0 %863
        %v866 = vpack.c.bf16 %v855, %v855
        %v867 = vpack.c.bf16 %v858, %v858
        %v868 = vpack.c.bf16 %v861, %v861
        %v869 = vpack.c.bf16 %v864, %v864
        %871 = vrot.lane.b32.xlu0 %v850, 120
        %v872 = vpop.permute.xlu0 %871
        %874 = vrot.lane.b32.xlu0 %v850, 112
        %v875 = vpop.permute.xlu0 %874
        %877 = vrot.lane.b32.xlu0 %v850, 104
        %v878 = vpop.permute.xlu0 %877
        %v880 = vpack.c.bf16 %v850, %v850
        %v881 = vpack.c.bf16 %v872, %v872
        %v882 = vpack.c.bf16 %v875, %v875
        %v883 = vpack.c.bf16 %v878, %v878
        %v884 = vld [vmem:[%s622] sm:$0xf]
        %v885 = vunpack.c.l.bf16 %v884
        %887 = vrot.lane.b32.xlu0 %v880, 96
        %v888 = vpop.permute.xlu0 %887
        %vm889 = vcmask 64512
        %v891 = vsel %vm889, %v866, 0
        %v894 = vsel %vm889, %v888, 0
        %896 = vmatprep.subr.bf16.mxu0 0
        %897 = vmatpush1.bf16.xpose.msra.mxu0 %v894
        %898 = vmatprep.subr.bf16.mxu0 0
        %899 = vmatpush1.bf16.xpose.msra.mxu0 0
        %900 = vmatprep.subr.bf16.mxu0 0
        %901 = vmatpush1.bf16.xpose.msra.mxu0 0
        %902 = vmatprep.subr.bf16.mxu0 0
        %903 = vmatpush1.bf16.xpose.msra.mxu0 0
        %904 = vmatprep.subr.bf16.mxu0 0
        %905 = vmatpush1.bf16.xpose.msra.mxu0 0
        %906 = vmatprep.subr.bf16.mxu0 0
        %907 = vmatpush1.bf16.xpose.msra.mxu0 0
        %908 = vmatprep.subr.bf16.mxu0 0
        %909 = vmatpush1.bf16.xpose.msra.mxu0 0
        %910 = vmatprep.subr.bf16.mxu0 0
        %911 = vmatpush1.bf16.xpose.msra.mxu0 0
        %912 = vmatprep.subr.bf16.mxu0 0
        %913 = vmatpush1.bf16.xpose.msra.mxu0 0
        %914 = vmatprep.subr.bf16.mxu0 0
        %915 = vmatpush1.bf16.xpose.msra.mxu0 0
        %916 = vmatprep.subr.bf16.mxu0 0
        %917 = vmatpush1.bf16.xpose.msra.mxu0 0
        %918 = vmatprep.subr.bf16.mxu0 0
        %919 = vmatpush1.bf16.xpose.msra.mxu0 0
        %920 = vmatprep.subr.bf16.mxu0 0
        %921 = vmatpush1.bf16.xpose.msra.mxu0 0
        %922 = vmatprep.subr.bf16.mxu0 0
        %923 = vmatpush1.bf16.xpose.msra.mxu0 0
        %924 = vmatprep.subr.bf16.mxu0 0
        %925 = vmatpush1.bf16.xpose.msra.mxu0 0
        %926 = vmatprep.subr.bf16.mxu0 0
        %927 = vmatpush1.bf16.xpose.msra.mxu0 0
        %928 = vmatprep.mubr.bf16.mxu0 0
        %929 = vmatmul.mubr.bf16.gmra.mrb[0].mxu0 %v891
        %v930 = vpop.f32.mrb[0].mxu0
        %v931 = vadd.f32 %v885, %v930
        %v932 = vpop.f32.mrb[0].mxu0
        %v933 = vpop.f32.mrb[0].mxu0
        %v934 = vpop.f32.mrb[0].mxu0
        %935 = vdwg.mxu0
        %937 = vrot.lane.b32.xlu0 %v881, 96
        %v938 = vpop.permute.xlu0 %937
        %v940 = vsel %vm889, %v867, 0
        %v943 = vsel %vm889, %v938, 0
        %945 = vmatprep.subr.bf16.mxu0 0
        %946 = vmatpush1.bf16.xpose.msra.mxu0 %v943
        %947 = vmatprep.subr.bf16.mxu0 0
        %948 = vmatpush1.bf16.xpose.msra.mxu0 0
        %949 = vmatprep.subr.bf16.mxu0 0
        %950 = vmatpush1.bf16.xpose.msra.mxu0 0
        %951 = vmatprep.subr.bf16.mxu0 0
        %952 = vmatpush1.bf16.xpose.msra.mxu0 0
        %953 = vmatprep.subr.bf16.mxu0 0
        %954 = vmatpush1.bf16.xpose.msra.mxu0 0
        %955 = vmatprep.subr.bf16.mxu0 0
        %956 = vmatpush1.bf16.xpose.msra.mxu0 0
        %957 = vmatprep.subr.bf16.mxu0 0
        %958 = vmatpush1.bf16.xpose.msra.mxu0 0
        %959 = vmatprep.subr.bf16.mxu0 0
        %960 = vmatpush1.bf16.xpose.msra.mxu0 0
        %961 = vmatprep.subr.bf16.mxu0 0
        %962 = vmatpush1.bf16.xpose.msra.mxu0 0
        %963 = vmatprep.subr.bf16.mxu0 0
        %964 = vmatpush1.bf16.xpose.msra.mxu0 0
        %965 = vmatprep.subr.bf16.mxu0 0
        %966 = vmatpush1.bf16.xpose.msra.mxu0 0
        %967 = vmatprep.subr.bf16.mxu0 0
        %968 = vmatpush1.bf16.xpose.msra.mxu0 0
        %969 = vmatprep.subr.bf16.mxu0 0
        %970 = vmatpush1.bf16.xpose.msra.mxu0 0
        %971 = vmatprep.subr.bf16.mxu0 0
        %972 = vmatpush1.bf16.xpose.msra.mxu0 0
        %973 = vmatprep.subr.bf16.mxu0 0
        %974 = vmatpush1.bf16.xpose.msra.mxu0 0
        %975 = vmatprep.subr.bf16.mxu0 0
        %976 = vmatpush1.bf16.xpose.msra.mxu0 0
        %977 = vmatprep.mubr.bf16.mxu0 0
        %978 = vmatmul.mubr.bf16.gmra.mrb[0].mxu0 %v940
        %v979 = vpop.f32.mrb[0].mxu0
        %v980 = vadd.f32 %v885, %v979
        %v981 = vpop.f32.mrb[0].mxu0
        %v982 = vpop.f32.mrb[0].mxu0
        %v983 = vpop.f32.mrb[0].mxu0
        %984 = vdwg.mxu0
        %986 = vrot.lane.b32.xlu0 %v882, 96
        %v987 = vpop.permute.xlu0 %986
        %v989 = vsel %vm889, %v868, 0
        %v992 = vsel %vm889, %v987, 0
        %994 = vmatprep.subr.bf16.mxu0 0
        %995 = vmatpush1.bf16.xpose.msra.mxu0 %v992
        %996 = vmatprep.subr.bf16.mxu0 0
        %997 = vmatpush1.bf16.xpose.msra.mxu0 0
        %998 = vmatprep.subr.bf16.mxu0 0
        %999 = vmatpush1.bf16.xpose.msra.mxu0 0
        %1000 = vmatprep.subr.bf16.mxu0 0
        %1001 = vmatpush1.bf16.xpose.msra.mxu0 0
        %1002 = vmatprep.subr.bf16.mxu0 0
        %1003 = vmatpush1.bf16.xpose.msra.mxu0 0
        %1004 = vmatprep.subr.bf16.mxu0 0
        %1005 = vmatpush1.bf16.xpose.msra.mxu0 0
        %1006 = vmatprep.subr.bf16.mxu0 0
        %1007 = vmatpush1.bf16.xpose.msra.mxu0 0
        %1008 = vmatprep.subr.bf16.mxu0 0
        %1009 = vmatpush1.bf16.xpose.msra.mxu0 0
        %1010 = vmatprep.subr.bf16.mxu0 0
        %1011 = vmatpush1.bf16.xpose.msra.mxu0 0
        %1012 = vmatprep.subr.bf16.mxu0 0
        %1013 = vmatpush1.bf16.xpose.msra.mxu0 0
        %1014 = vmatprep.subr.bf16.mxu0 0
        %1015 = vmatpush1.bf16.xpose.msra.mxu0 0
        %1016 = vmatprep.subr.bf16.mxu0 0
        %1017 = vmatpush1.bf16.xpose.msra.mxu0 0
        %1018 = vmatprep.subr.bf16.mxu0 0
        %1019 = vmatpush1.bf16.xpose.msra.mxu0 0
        %1020 = vmatprep.subr.bf16.mxu0 0
        %1021 = vmatpush1.bf16.xpose.msra.mxu0 0
        %1022 = vmatprep.subr.bf16.mxu0 0
        %1023 = vmatpush1.bf16.xpose.msra.mxu0 0
        %1024 = vmatprep.subr.bf16.mxu0 0
        %1025 = vmatpush1.bf16.xpose.msra.mxu0 0
        %1026 = vmatprep.mubr.bf16.mxu0 0
        %1027 = vmatmul.mubr.bf16.gmra.mrb[0].mxu0 %v989
        %v1028 = vpop.f32.mrb[0].mxu0
        %v1029 = vadd.f32 %v885, %v1028
        %v1030 = vpop.f32.mrb[0].mxu0
        %v1031 = vpop.f32.mrb[0].mxu0
        %v1032 = vpop.f32.mrb[0].mxu0
        %1033 = vdwg.mxu0
        %1035 = vrot.lane.b32.xlu0 %v883, 96
        %v1036 = vpop.permute.xlu0 %1035
        %v1038 = vsel %vm889, %v869, 0
        %v1041 = vsel %vm889, %v1036, 0
        %1043 = vmatprep.subr.bf16.mxu0 0
        %1044 = vmatpush1.bf16.xpose.msra.mxu0 %v1041
        %1045 = vmatprep.subr.bf16.mxu0 0
        %1046 = vmatpush1.bf16.xpose.msra.mxu0 0
        %1047 = vmatprep.subr.bf16.mxu0 0
        %1048 = vmatpush1.bf16.xpose.msra.mxu0 0
        %1049 = vmatprep.subr.bf16.mxu0 0
        %1050 = vmatpush1.bf16.xpose.msra.mxu0 0
        %1051 = vmatprep.subr.bf16.mxu0 0
        %1052 = vmatpush1.bf16.xpose.msra.mxu0 0
        %1053 = vmatprep.subr.bf16.mxu0 0
        %1054 = vmatpush1.bf16.xpose.msra.mxu0 0
        %1055 = vmatprep.subr.bf16.mxu0 0
        %1056 = vmatpush1.bf16.xpose.msra.mxu0 0
        %1057 = vmatprep.subr.bf16.mxu0 0
        %1058 = vmatpush1.bf16.xpose.msra.mxu0 0
        %1059 = vmatprep.subr.bf16.mxu0 0
        %1060 = vmatpush1.bf16.xpose.msra.mxu0 0
        %1061 = vmatprep.subr.bf16.mxu0 0
        %1062 = vmatpush1.bf16.xpose.msra.mxu0 0
        %1063 = vmatprep.subr.bf16.mxu0 0
        %1064 = vmatpush1.bf16.xpose.msra.mxu0 0
        %1065 = vmatprep.subr.bf16.mxu0 0
        %1066 = vmatpush1.bf16.xpose.msra.mxu0 0
        %1067 = vmatprep.subr.bf16.mxu0 0
        %1068 = vmatpush1.bf16.xpose.msra.mxu0 0
        %1069 = vmatprep.subr.bf16.mxu0 0
        %1070 = vmatpush1.bf16.xpose.msra.mxu0 0
        %1071 = vmatprep.subr.bf16.mxu0 0
        %1072 = vmatpush1.bf16.xpose.msra.mxu0 0
        %1073 = vmatprep.subr.bf16.mxu0 0
        %1074 = vmatpush1.bf16.xpose.msra.mxu0 0
        %1075 = vmatprep.mubr.bf16.mxu0 0
        %1076 = vmatmul.mubr.bf16.gmra.mrb[0].mxu0 %v1038
        %v1077 = vpop.f32.mrb[0].mxu0
        %v1078 = vadd.f32 %v885, %v1077
        %v1079 = vpop.f32.mrb[0].mxu0
        %v1080 = vpop.f32.mrb[0].mxu0
        %v1081 = vpop.f32.mrb[0].mxu0
        %1082 = vdwg.mxu0
        %v1083 = vsel %vm889, %v931, -inf
        %1084 = vmax.xlane.f32.xlu0 %v1083
        %v1085 = vpop.xlane.xlu0 %1084
        %v1086 = vsel %vm889, %v980, -inf
        %1087 = vmax.xlane.f32.xlu0 %v1086
        %v1088 = vpop.xlane.xlu0 %1087
        %v1089 = vsel %vm889, %v1029, -inf
        %1090 = vmax.xlane.f32.xlu0 %v1089
        %v1091 = vpop.xlane.xlu0 %1090
        %v1092 = vsel %vm889, %v1078, -inf
        %1093 = vmax.xlane.f32.xlu0 %v1092
        %v1094 = vpop.xlane.xlu0 %1093
        %v1095 = vsub.f32 %v931, %v1085
        %v1096 = vsub.f32 %v980, %v1088
        %v1097 = vsub.f32 %v1029, %v1091
        %v1098 = vsub.f32 %v1078, %v1094
        %v1099 = vmul.f32 %v1095, 1.442695
        %v1100 = vpow.pop %v1099
        %v1101 = vmul.f32 %v1096, 1.442695
        %v1102 = vpow.pop %v1101
        %v1103 = vmul.f32 %v1097, 1.442695
        %v1104 = vpow.pop %v1103
        %v1105 = vmul.f32 %v1098, 1.442695
        %v1106 = vpow.pop %v1105
        %v1107 = vsel %vm889, %v1100, 0.0
        %1108 = vadd.xlane.f32.xlu0 %v1107
        %v1109 = vpop.xlane.xlu0 %1108
        %v1110 = vsel %vm889, %v1102, 0.0
        %1111 = vadd.xlane.f32.xlu0 %v1110
        %v1112 = vpop.xlane.xlu0 %1111
        %v1113 = vsel %vm889, %v1104, 0.0
        %1114 = vadd.xlane.f32.xlu0 %v1113
        %v1115 = vpop.xlane.xlu0 %1114
        %v1116 = vsel %vm889, %v1106, 0.0
        %1117 = vadd.xlane.f32.xlu0 %v1116
        %v1118 = vpop.xlane.xlu0 %1117
        %v1119 = vpack.c.bf16 %v1100, %v1100
        %v1120 = vpack.c.bf16 %v1102, %v1102
        %v1121 = vpack.c.bf16 %v1104, %v1104
        %v1122 = vpack.c.bf16 %v1106, %v1106
        %1123 = vrot.lane.b32.xlu0 %v880, 64
        %v1124 = vpop.permute.xlu0 %1123
        %v1126 = vsel %vm889, %v1119, 0
        %vm1128 = vcmask 1043456
        %v1130 = vsel %vm1128, %v1124, 0
        %1132 = vmatprep.subr.bf16.mxu0 0
        %1133 = vmatpush1.bf16.msra.mxu0 %v1130
        %1134 = vmatprep.subr.bf16.mxu0 0
        %1135 = vmatpush1.bf16.msra.mxu0 0
        %1136 = vmatprep.subr.bf16.mxu0 0
        %1137 = vmatpush1.bf16.msra.mxu0 0
        %1138 = vmatprep.subr.bf16.mxu0 0
        %1139 = vmatpush1.bf16.msra.mxu0 0
        %1140 = vmatprep.subr.bf16.mxu0 0
        %1141 = vmatpush1.bf16.msra.mxu0 0
        %1142 = vmatprep.subr.bf16.mxu0 0
        %1143 = vmatpush1.bf16.msra.mxu0 0
        %1144 = vmatprep.subr.bf16.mxu0 0
        %1145 = vmatpush1.bf16.msra.mxu0 0
        %1146 = vmatprep.subr.bf16.mxu0 0
        %1147 = vmatpush1.bf16.msra.mxu0 0
        %1148 = vmatprep.subr.bf16.mxu0 0
        %1149 = vmatpush1.bf16.msra.mxu0 0
        %1150 = vmatprep.subr.bf16.mxu0 0
        %1151 = vmatpush1.bf16.msra.mxu0 0
        %1152 = vmatprep.subr.bf16.mxu0 0
        %1153 = vmatpush1.bf16.msra.mxu0 0
        %1154 = vmatprep.subr.bf16.mxu0 0
        %1155 = vmatpush1.bf16.msra.mxu0 0
        %1156 = vmatprep.subr.bf16.mxu0 0
        %1157 = vmatpush1.bf16.msra.mxu0 0
        %1158 = vmatprep.subr.bf16.mxu0 0
        %1159 = vmatpush1.bf16.msra.mxu0 0
        %1160 = vmatprep.subr.bf16.mxu0 0
        %1161 = vmatpush1.bf16.msra.mxu0 0
        %1162 = vmatprep.subr.bf16.mxu0 0
        %1163 = vmatpush1.bf16.msra.mxu0 0
        %1164 = vmatprep.mubr.bf16.mxu0 0
        %1165 = vmatmul.mubr.bf16.gmra.mrb[0].mxu0 %v1126
        %v1166 = vpop.f32.mrb[0].mxu0
        %v1167 = vadd.f32 0.0, %v1166
        %v1168 = vpop.f32.mrb[0].mxu0
        %v1169 = vpop.f32.mrb[0].mxu0
        %v1170 = vpop.f32.mrb[0].mxu0
        %1171 = vdwg.mxu0
        %1172 = vrot.lane.b32.xlu0 %v881, 64
        %v1173 = vpop.permute.xlu0 %1172
        %v1175 = vsel %vm889, %v1120, 0
        %v1178 = vsel %vm1128, %v1173, 0
        %1180 = vmatprep.subr.bf16.mxu0 0
        %1181 = vmatpush1.bf16.msra.mxu0 %v1178
        %1182 = vmatprep.subr.bf16.mxu0 0
        %1183 = vmatpush1.bf16.msra.mxu0 0
        %1184 = vmatprep.subr.bf16.mxu0 0
        %1185 = vmatpush1.bf16.msra.mxu0 0
        %1186 = vmatprep.subr.bf16.mxu0 0
        %1187 = vmatpush1.bf16.msra.mxu0 0
        %1188 = vmatprep.subr.bf16.mxu0 0
        %1189 = vmatpush1.bf16.msra.mxu0 0
        %1190 = vmatprep.subr.bf16.mxu0 0
        %1191 = vmatpush1.bf16.msra.mxu0 0
        %1192 = vmatprep.subr.bf16.mxu0 0
        %1193 = vmatpush1.bf16.msra.mxu0 0
        %1194 = vmatprep.subr.bf16.mxu0 0
        %1195 = vmatpush1.bf16.msra.mxu0 0
        %1196 = vmatprep.subr.bf16.mxu0 0
        %1197 = vmatpush1.bf16.msra.mxu0 0
        %1198 = vmatprep.subr.bf16.mxu0 0
        %1199 = vmatpush1.bf16.msra.mxu0 0
        %1200 = vmatprep.subr.bf16.mxu0 0
        %1201 = vmatpush1.bf16.msra.mxu0 0
        %1202 = vmatprep.subr.bf16.mxu0 0
        %1203 = vmatpush1.bf16.msra.mxu0 0
        %1204 = vmatprep.subr.bf16.mxu0 0
        %1205 = vmatpush1.bf16.msra.mxu0 0
        %1206 = vmatprep.subr.bf16.mxu0 0
        %1207 = vmatpush1.bf16.msra.mxu0 0
        %1208 = vmatprep.subr.bf16.mxu0 0
        %1209 = vmatpush1.bf16.msra.mxu0 0
        %1210 = vmatprep.subr.bf16.mxu0 0
        %1211 = vmatpush1.bf16.msra.mxu0 0
        %1212 = vmatprep.mubr.bf16.mxu0 0
        %1213 = vmatmul.mubr.bf16.gmra.mrb[0].mxu0 %v1175
        %v1214 = vpop.f32.mrb[0].mxu0
        %v1215 = vadd.f32 0.0, %v1214
        %v1216 = vpop.f32.mrb[0].mxu0
        %v1217 = vpop.f32.mrb[0].mxu0
        %v1218 = vpop.f32.mrb[0].mxu0
        %1219 = vdwg.mxu0
        %1220 = vrot.lane.b32.xlu0 %v882, 64
        %v1221 = vpop.permute.xlu0 %1220
        %v1223 = vsel %vm889, %v1121, 0
        %v1226 = vsel %vm1128, %v1221, 0
        %1228 = vmatprep.subr.bf16.mxu0 0
        %1229 = vmatpush1.bf16.msra.mxu0 %v1226
        %1230 = vmatprep.subr.bf16.mxu0 0
        %1231 = vmatpush1.bf16.msra.mxu0 0
        %1232 = vmatprep.subr.bf16.mxu0 0
        %1233 = vmatpush1.bf16.msra.mxu0 0
        %1234 = vmatprep.subr.bf16.mxu0 0
        %1235 = vmatpush1.bf16.msra.mxu0 0
        %1236 = vmatprep.subr.bf16.mxu0 0
        %1237 = vmatpush1.bf16.msra.mxu0 0
        %1238 = vmatprep.subr.bf16.mxu0 0
        %1239 = vmatpush1.bf16.msra.mxu0 0
        %1240 = vmatprep.subr.bf16.mxu0 0
        %1241 = vmatpush1.bf16.msra.mxu0 0
        %1242 = vmatprep.subr.bf16.mxu0 0
        %1243 = vmatpush1.bf16.msra.mxu0 0
        %1244 = vmatprep.subr.bf16.mxu0 0
        %1245 = vmatpush1.bf16.msra.mxu0 0
        %1246 = vmatprep.subr.bf16.mxu0 0
        %1247 = vmatpush1.bf16.msra.mxu0 0
        %1248 = vmatprep.subr.bf16.mxu0 0
        %1249 = vmatpush1.bf16.msra.mxu0 0
        %1250 = vmatprep.subr.bf16.mxu0 0
        %1251 = vmatpush1.bf16.msra.mxu0 0
        %1252 = vmatprep.subr.bf16.mxu0 0
        %1253 = vmatpush1.bf16.msra.mxu0 0
        %1254 = vmatprep.subr.bf16.mxu0 0
        %1255 = vmatpush1.bf16.msra.mxu0 0
        %1256 = vmatprep.subr.bf16.mxu0 0
        %1257 = vmatpush1.bf16.msra.mxu0 0
        %1258 = vmatprep.subr.bf16.mxu0 0
        %1259 = vmatpush1.bf16.msra.mxu0 0
        %1260 = vmatprep.mubr.bf16.mxu0 0
        %1261 = vmatmul.mubr.bf16.gmra.mrb[0].mxu0 %v1223
        %v1262 = vpop.f32.mrb[0].mxu0
        %v1263 = vadd.f32 0.0, %v1262
        %v1264 = vpop.f32.mrb[0].mxu0
        %v1265 = vpop.f32.mrb[0].mxu0
        %v1266 = vpop.f32.mrb[0].mxu0
        %1267 = vdwg.mxu0
        %1268 = vrot.lane.b32.xlu0 %v883, 64
        %v1269 = vpop.permute.xlu0 %1268
        %v1271 = vsel %vm889, %v1122, 0
        %v1274 = vsel %vm1128, %v1269, 0
        %1276 = vmatprep.subr.bf16.mxu0 0
        %1277 = vmatpush1.bf16.msra.mxu0 %v1274
        %1278 = vmatprep.subr.bf16.mxu0 0
        %1279 = vmatpush1.bf16.msra.mxu0 0
        %1280 = vmatprep.subr.bf16.mxu0 0
        %1281 = vmatpush1.bf16.msra.mxu0 0
        %1282 = vmatprep.subr.bf16.mxu0 0
        %1283 = vmatpush1.bf16.msra.mxu0 0
        %1284 = vmatprep.subr.bf16.mxu0 0
        %1285 = vmatpush1.bf16.msra.mxu0 0
        %1286 = vmatprep.subr.bf16.mxu0 0
        %1287 = vmatpush1.bf16.msra.mxu0 0
        %1288 = vmatprep.subr.bf16.mxu0 0
        %1289 = vmatpush1.bf16.msra.mxu0 0
        %1290 = vmatprep.subr.bf16.mxu0 0
        %1291 = vmatpush1.bf16.msra.mxu0 0
        %1292 = vmatprep.subr.bf16.mxu0 0
        %1293 = vmatpush1.bf16.msra.mxu0 0
        %1294 = vmatprep.subr.bf16.mxu0 0
        %1295 = vmatpush1.bf16.msra.mxu0 0
        %1296 = vmatprep.subr.bf16.mxu0 0
        %1297 = vmatpush1.bf16.msra.mxu0 0
        %1298 = vmatprep.subr.bf16.mxu0 0
        %1299 = vmatpush1.bf16.msra.mxu0 0
        %1300 = vmatprep.subr.bf16.mxu0 0
        %1301 = vmatpush1.bf16.msra.mxu0 0
        %1302 = vmatprep.subr.bf16.mxu0 0
        %1303 = vmatpush1.bf16.msra.mxu0 0
        %1304 = vmatprep.subr.bf16.mxu0 0
        %1305 = vmatpush1.bf16.msra.mxu0 0
        %1306 = vmatprep.subr.bf16.mxu0 0
        %1307 = vmatpush1.bf16.msra.mxu0 0
        %1308 = vmatprep.mubr.bf16.mxu0 0
        %1309 = vmatmul.mubr.bf16.gmra.mrb[0].mxu0 %v1271
        %v1310 = vpop.f32.mrb[0].mxu0
        %v1311 = vadd.f32 0.0, %v1310
        %v1312 = vpop.f32.mrb[0].mxu0
        %v1313 = vpop.f32.mrb[0].mxu0
        %v1314 = vpop.f32.mrb[0].mxu0
        %1315 = vdwg.mxu0
        %v1316 = vrcp.pop %v1109
        %v1317 = vrcp.pop %v1112
        %v1318 = vrcp.pop %v1115
        %v1319 = vrcp.pop %v1118
        %v1320 = vmul.f32 %v1167, %v1316
        %v1321 = vmul.f32 %v1215, %v1317
        %v1322 = vmul.f32 %v1263, %v1318
        %v1323 = vmul.f32 %v1311, %v1319
        %1324 = vst.msk [vmem:[#allocation2] sm:$0xff] %vm889, %v1320
        %1326 = vrot.lane.b32.xlu0 %v1321, 8
        %v1327 = vpop.permute.xlu0 %1326
        %vm1329 = vcmask 130112
        %1330 = vst.msk [vmem:[#allocation2] sm:$0xff] %vm1329, %v1327
        %1332 = vrot.lane.b32.xlu0 %v1322, 16
        %v1333 = vpop.permute.xlu0 %1332
        %vm1335 = vcmask 195712
        %1336 = vst.msk [vmem:[#allocation2] sm:$0xff] %vm1335, %v1333
        %1338 = vrot.lane.b32.xlu0 %v1323, 24
        %v1339 = vpop.permute.xlu0 %1338
        %vm1341 = vcmask 261312
        %1342 = vst.msk [vmem:[#allocation2] sm:$0xff] %vm1341, %v1339
        %v1343 = vld [vmem:[#allocation2] sm:$0xff]
        %v1344 = vpack.c.bf16 %v1343, %v1343
        %v1345 = vld [vmem:[%s755] sm:$0xf]
        %v1346 = vld [vmem:[%s755 + $0x4] sm:$0xf]
        %v1347 = vld [vmem:[%s755 + $0x8] sm:$0xf]
        %v1348 = vld [vmem:[%s755 + $0xc] sm:$0xf]
        %v1349 = vld [vmem:[%s758] sm:$0x1]
        %v1351 = vlaneseq
        %v1352 = vshrl.u32 %v1351, 7
        %v1353 = vsub.s32 0, %v1352
        %v1354 = vrot.slane %v1349, %v1353
        %v1360 = vunpack.c.l.b16 %v1345
        %v1361 = vunpack.c.l.b16 %v1346
        %v1362 = vunpack.c.l.b16 %v1347
        %v1363 = vunpack.c.l.b16 %v1348
        %v1364 = vpack.c.b16 %v1361, %v1360
        %v1365 = vpack.c.b16 %v1363, %v1362
        %v1369 = vsel %vm811, %v1344, 0
        %1371 = vmatprep.subr.bf16.mxu0 0
        %1372 = vmatpush1.bf16.msra.mxu0 %v1364
        %1373 = vmatprep.subr.bf16.mxu0 0
        %1374 = vmatpush1.bf16.msra.mxu0 %v1365
        %1375 = vmatprep.subr.bf16.mxu0 0
        %1376 = vmatpush1.bf16.msra.mxu0 0
        %1377 = vmatprep.subr.bf16.mxu0 0
        %1378 = vmatpush1.bf16.msra.mxu0 0
        %1379 = vmatprep.subr.bf16.mxu0 0
        %1380 = vmatpush1.bf16.msra.mxu0 0
        %1381 = vmatprep.subr.bf16.mxu0 0
        %1382 = vmatpush1.bf16.msra.mxu0 0
        %1383 = vmatprep.subr.bf16.mxu0 0
        %1384 = vmatpush1.bf16.msra.mxu0 0
        %1385 = vmatprep.subr.bf16.mxu0 0
        %1386 = vmatpush1.bf16.msra.mxu0 0
        %1387 = vmatprep.subr.bf16.mxu0 0
        %1388 = vmatpush1.bf16.msra.mxu0 0
        %1389 = vmatprep.subr.bf16.mxu0 0
        %1390 = vmatpush1.bf16.msra.mxu0 0
        %1391 = vmatprep.subr.bf16.mxu0 0
        %1392 = vmatpush1.bf16.msra.mxu0 0
        %1393 = vmatprep.subr.bf16.mxu0 0
        %1394 = vmatpush1.bf16.msra.mxu0 0
        %1395 = vmatprep.subr.bf16.mxu0 0
        %1396 = vmatpush1.bf16.msra.mxu0 0
        %1397 = vmatprep.subr.bf16.mxu0 0
        %1398 = vmatpush1.bf16.msra.mxu0 0
        %1399 = vmatprep.subr.bf16.mxu0 0
        %1400 = vmatpush1.bf16.msra.mxu0 0
        %1401 = vmatprep.subr.bf16.mxu0 0
        %1402 = vmatpush1.bf16.msra.mxu0 0
        %1403 = vmatprep.mubr.bf16.mxu0 0
        %1404 = vmatmul.mubr.bf16.gmra.mrb[0].mxu0 %v1369
        %v1405 = vpop.f32.mrb[0].mxu0
        %v1406 = vadd.f32 %v1354, %v1405
        %v1407 = vpop.f32.mrb[0].mxu0
        %v1408 = vpop.f32.mrb[0].mxu0
        %v1409 = vpop.f32.mrb[0].mxu0
        %1410 = vdwg.mxu0
        %v1411 = vadd.f32 %v786, %v1406
        %v1412 = vld [vmem:[%s630] sm:$0x1]
        %v1413 = vld [vmem:[%s638] sm:$0x1]
        %v1414 = vsel %vm811, %v1411, 0.0
        %1415 = vadd.xlane.f32.xlu0 %v1414
        %v1416 = vpop.xlane.xlu0 %1415
        %v1417 = vrcp.pop 32.0
        %v1418 = vmul.f32 %v1416, %v1417
        %v1419 = vsub.f32 %v1411, %v1418
        %v1420 = vmul.f32 %v1419, %v1419
        %v1421 = vsel %vm811, %v1420, 0.0
        %1422 = vadd.xlane.f32.xlu0 %v1421
        %v1423 = vpop.xlane.xlu0 %1422
        %v1424 = vmul.f32 %v1423, %v1417
        %v1425 = vadd.f32 %v1424, 1e-06
        %v1426 = vrsqrt.pop %v1425
        %v1427 = vmul.f32 %v1419, %v1426
        %v1429 = vlaneseq
        %v1430 = vshrl.u32 %v1429, 7
        %v1431 = vsub.s32 0, %v1430
        %v1432 = vrot.slane %v1412, %v1431
        %v1434 = vmul.f32 %v1427, %v1432
        %v1436 = vlaneseq
        %v1437 = vshrl.u32 %v1436, 7
        %v1438 = vsub.s32 0, %v1437
        %v1439 = vrot.slane %v1413, %v1438
        %v1441 = vadd.f32 %v1434, %v1439
        %v1442 = vpack.c.bf16 %v1441, %v1441
        %v1443 = vld [vmem:[%s763] sm:$0xf]
        %v1444 = vld [vmem:[%s763 + $0x4] sm:$0xf]
        %v1445 = vld [vmem:[%s763 + $0x8] sm:$0xf]
        %v1446 = vld [vmem:[%s763 + $0xc] sm:$0xf]
        %v1447 = vld [vmem:[%s646] sm:$0x1]
        %v1449 = vlaneseq
        %v1450 = vshrl.u32 %v1449, 7
        %v1451 = vsub.s32 0, %v1450
        %v1452 = vrot.slane %v1447, %v1451
        %v1458 = vunpack.c.l.b16 %v1443
        %v1459 = vunpack.c.l.b16 %v1444
        %v1460 = vunpack.c.l.b16 %v1445
        %v1461 = vunpack.c.l.b16 %v1446
        %v1462 = vpack.c.b16 %v1459, %v1458
        %v1463 = vpack.c.b16 %v1461, %v1460
        %v1467 = vsel %vm811, %v1442, 0
        %1469 = vmatprep.subr.bf16.mxu0 0
        %1470 = vmatpush1.bf16.msra.mxu0 %v1462
        %1471 = vmatprep.subr.bf16.mxu0 0
        %1472 = vmatpush1.bf16.msra.mxu0 %v1463
        %1473 = vmatprep.subr.bf16.mxu0 0
        %1474 = vmatpush1.bf16.msra.mxu0 0
        %1475 = vmatprep.subr.bf16.mxu0 0
        %1476 = vmatpush1.bf16.msra.mxu0 0
        %1477 = vmatprep.subr.bf16.mxu0 0
        %1478 = vmatpush1.bf16.msra.mxu0 0
        %1479 = vmatprep.subr.bf16.mxu0 0
        %1480 = vmatpush1.bf16.msra.mxu0 0
        %1481 = vmatprep.subr.bf16.mxu0 0
        %1482 = vmatpush1.bf16.msra.mxu0 0
        %1483 = vmatprep.subr.bf16.mxu0 0
        %1484 = vmatpush1.bf16.msra.mxu0 0
        %1485 = vmatprep.subr.bf16.mxu0 0
        %1486 = vmatpush1.bf16.msra.mxu0 0
        %1487 = vmatprep.subr.bf16.mxu0 0
        %1488 = vmatpush1.bf16.msra.mxu0 0
        %1489 = vmatprep.subr.bf16.mxu0 0
        %1490 = vmatpush1.bf16.msra.mxu0 0
        %1491 = vmatprep.subr.bf16.mxu0 0
        %1492 = vmatpush1.bf16.msra.mxu0 0
        %1493 = vmatprep.subr.bf16.mxu0 0
        %1494 = vmatpush1.bf16.msra.mxu0 0
        %1495 = vmatprep.subr.bf16.mxu0 0
        %1496 = vmatpush1.bf16.msra.mxu0 0
        %1497 = vmatprep.subr.bf16.mxu0 0
        %1498 = vmatpush1.bf16.msra.mxu0 0
        %1499 = vmatprep.subr.bf16.mxu0 0
        %1500 = vmatpush1.bf16.msra.mxu0 0
        %1501 = vmatprep.mubr.bf16.mxu0 0
        %1502 = vmatmul.mubr.bf16.gmra.mrb[0].mxu0 %v1467
        %v1503 = vpop.f32.mrb[0].mxu0
        %v1504 = vadd.f32 %v1452, %v1503
        %v1505 = vpop.f32.mrb[0].mxu0
        %v1506 = vpop.f32.mrb[0].mxu0
        %v1507 = vpop.f32.mrb[0].mxu0
        %1508 = vdwg.mxu0
        %v1509 = vmax.f32 %v1504, 0.0
        %v1510 = vpack.c.bf16 %v1509, %v1509
        %v1511 = vld [vmem:[%s768] sm:$0xf]
        %v1512 = vld [vmem:[%s768 + $0x4] sm:$0xf]
        %v1513 = vld [vmem:[%s768 + $0x8] sm:$0xf]
        %v1514 = vld [vmem:[%s768 + $0xc] sm:$0xf]
        %v1515 = vld [vmem:[%s768 + $0x10] sm:$0xf]
        %v1516 = vld [vmem:[%s768 + $0x14] sm:$0xf]
        %v1517 = vld [vmem:[%s768 + $0x18] sm:$0xf]
        %v1518 = vld [vmem:[%s768 + $0x1c] sm:$0xf]
        %v1519 = vld [vmem:[%s771] sm:$0x1]
        %v1521 = vlaneseq
        %v1522 = vshrl.u32 %v1521, 7
        %v1523 = vsub.s32 0, %v1522
        %v1524 = vrot.slane %v1519, %v1523
        %v1534 = vunpack.c.l.b16 %v1511
        %v1535 = vunpack.c.l.b16 %v1512
        %v1536 = vunpack.c.l.b16 %v1513
        %v1537 = vunpack.c.l.b16 %v1514
        %v1538 = vunpack.c.l.b16 %v1515
        %v1539 = vunpack.c.l.b16 %v1516
        %v1540 = vunpack.c.l.b16 %v1517
        %v1541 = vunpack.c.l.b16 %v1518
        %v1542 = vpack.c.b16 %v1535, %v1534
        %v1543 = vpack.c.b16 %v1537, %v1536
        %v1544 = vpack.c.b16 %v1539, %v1538
        %v1545 = vpack.c.b16 %v1541, %v1540
        %vm1550 = vcmask 523264
        %v1552 = vsel %vm1550, %v1510, 0
        %1554 = vmatprep.subr.bf16.mxu0 0
        %1555 = vmatpush1.bf16.msra.mxu0 %v1542
        %1556 = vmatprep.subr.bf16.mxu0 0
        %1557 = vmatpush1.bf16.msra.mxu0 %v1543
        %1558 = vmatprep.subr.bf16.mxu0 0
        %1559 = vmatpush1.bf16.msra.mxu0 %v1544
        %1560 = vmatprep.subr.bf16.mxu0 0
        %1561 = vmatpush1.bf16.msra.mxu0 %v1545
        %1562 = vmatprep.subr.bf16.mxu0 0
        %1563 = vmatpush1.bf16.msra.mxu0 0
        %1564 = vmatprep.subr.bf16.mxu0 0
        %1565 = vmatpush1.bf16.msra.mxu0 0
        %1566 = vmatprep.subr.bf16.mxu0 0
        %1567 = vmatpush1.bf16.msra.mxu0 0
        %1568 = vmatprep.subr.bf16.mxu0 0
        %1569 = vmatpush1.bf16.msra.mxu0 0
        %1570 = vmatprep.subr.bf16.mxu0 0
        %1571 = vmatpush1.bf16.msra.mxu0 0
        %1572 = vmatprep.subr.bf16.mxu0 0
        %1573 = vmatpush1.bf16.msra.mxu0 0
        %1574 = vmatprep.subr.bf16.mxu0 0
        %1575 = vmatpush1.bf16.msra.mxu0 0
        %1576 = vmatprep.subr.bf16.mxu0 0
        %1577 = vmatpush1.bf16.msra.mxu0 0
        %1578 = vmatprep.subr.bf16.mxu0 0
        %1579 = vmatpush1.bf16.msra.mxu0 0
        %1580 = vmatprep.subr.bf16.mxu0 0
        %1581 = vmatpush1.bf16.msra.mxu0 0
        %1582 = vmatprep.subr.bf16.mxu0 0
        %1583 = vmatpush1.bf16.msra.mxu0 0
        %1584 = vmatprep.subr.bf16.mxu0 0
        %1585 = vmatpush1.bf16.msra.mxu0 0
        %1586 = vmatprep.mubr.bf16.mxu0 0
        %1587 = vmatmul.mubr.bf16.gmra.mrb[0].mxu0 %v1552
        %v1588 = vpop.f32.mrb[0].mxu0
        %v1589 = vadd.f32 %v1524, %v1588
        %v1590 = vpop.f32.mrb[0].mxu0
        %v1591 = vpop.f32.mrb[0].mxu0
        %v1592 = vpop.f32.mrb[0].mxu0
        %1593 = vdwg.mxu0
        %v1594 = vmax.f32 %v1589, 0.0
        %v1595 = vadd.f32 %v1594, %v1441
        %v1596 = vld [vmem:[%s774] sm:$0x1]
        %v1597 = vld [vmem:[%s777] sm:$0x1]
        %v1598 = vsel %vm811, %v1595, 0.0
        %1599 = vadd.xlane.f32.xlu0 %v1598
        %v1600 = vpop.xlane.xlu0 %1599
        %v1601 = vmul.f32 %v1600, %v1417
        %v1602 = vsub.f32 %v1595, %v1601
        %v1603 = vmul.f32 %v1602, %v1602
        %v1604 = vsel %vm811, %v1603, 0.0
        %1605 = vadd.xlane.f32.xlu0 %v1604
        %v1606 = vpop.xlane.xlu0 %1605
        %v1607 = vmul.f32 %v1606, %v1417
        %v1608 = vadd.f32 %v1607, 1e-06
        %v1609 = vrsqrt.pop %v1608
        %v1610 = vmul.f32 %v1602, %v1609
        %v1612 = vlaneseq
        %v1613 = vshrl.u32 %v1612, 7
        %v1614 = vsub.s32 0, %v1613
        %v1615 = vrot.slane %v1596, %v1614
        %v1617 = vmul.f32 %v1610, %v1615
        %v1619 = vlaneseq
        %v1620 = vshrl.u32 %v1619, 7
        %v1621 = vsub.s32 0, %v1620
        %v1622 = vrot.slane %v1597, %v1621
        %v1624 = vadd.f32 %v1617, %v1622
        %1625 = vst.msk [vmem:[%s742] sm:$0xff] %vm811, %v1624
        %s1626 = sand.u32 %s421, 1
        %s1627 = scalar_lea.sflag [#allocation5], %s1626
        %s1628 = sand.u32 %s421, 1
        %s1629 = smul.addr %s1628, 8
        %s1630 = scalar_lea.vmem [#allocation12], %s1629
        // Predicated region
        $region101: #{tpu_custom_call.1} parent=75 // pred_check
          %p1631 = pneg %p431
        $region102: #{tpu_custom_call.1} parent=75 // pred_check_branch
          %1633 = sbr.rel (%p1631) target = $region104
        $region103: #{tpu_custom_call.1} parent=75 // pred_region
          %s1635 = ssub.s32 128, 128
          %1636 = vsyncadd %s1627, %s1635
          %s1637 = smul.addr %s41, 128
          %s1638 = scalar_lea.hbm %s14, %s1637
          %s1640 = sshll.u32 %s1630, 4
          %s1641 = int_to_ptr.vmem [resolvable:$true] %s1640
          %1643 = dma.vmem_to_hbm [thread:$0]  %s1641, 128, %s1638, %s1627
        $region104: #{tpu_custom_call.1} parent=75 // pred_fallthru
          _
      $region76: #{tpu_custom_call.1} parent=5 // pred_fallthru
        _
      %p1644 = scmp.le.s32.totalorder 2, %s32
      // Predicated region
      $region105: #{tpu_custom_call.1} parent=5 // pred_check
        %p1645 = pneg %p1644
      $region106: #{tpu_custom_call.1} parent=5 // pred_check_branch
        %1647 = sbr.rel (%p1645) target = $region108
      $region107: #{tpu_custom_call.1} parent=5 // pred_region
        %s1648 = ssub.s32 %s32, 2
        // Predicated region
        $region109: #{tpu_custom_call.1} parent=107 // pred_check
          %p1649 = pneg %p437
        $region110: #{tpu_custom_call.1} parent=107 // pred_check_branch
          %1651 = sbr.rel (%p1649) target = $region112
        $region111: #{tpu_custom_call.1} parent=107 // pred_region
          %s1652 = sand.u32 %s422, 1
          %s1653 = scalar_lea.sflag [#allocation5], %s1652
          %s1654 = sand.u32 %s422, 1
          %s1655 = smul.addr %s1654, 8
          %s1656 = scalar_lea.vmem [#allocation12], %s1655
          %1657 = dma.done %s1653, 128
        $region112: #{tpu_custom_call.1} parent=107 // pred_fallthru
          _
      $region108: #{tpu_custom_call.1} parent=5 // pred_fallthru
        _
    $region6: #{tpu_custom_call.1} parent=1 // loop_footer
      %s36 = sadd.s32 1, %s32
    $region7: #{tpu_custom_call.1} parent=1 // loop_footer_branch
      %31 = sbr.rel target = $region3
    $region8: #{tpu_custom_call.1} parent=1 // loop_exit
      _
    %1658 = vsyncpa [#allocation4], 1
    %s1659 = scalar_lea.sflag [#allocation4], 1
    %1660 = vsyncpa %s1659, 1
    %1661 = vsyncpa [#allocation7], 1
    %s1662 = scalar_lea.sflag [#allocation7], 1
    %1663 = vsyncpa %s1662, 1
    %1664 = vsyncpa [#allocation10], 1
    %s1665 = scalar_lea.sflag [#allocation10], 1
    %1666 = vsyncpa %s1665, 1
    %1667 = vsyncpa [#allocation5], 1
    %s1668 = scalar_lea.sflag [#allocation5], 1
    %1669 = vsyncpa %s1668, 1

</llo_original>
